<compile_context>
chip_gen: v7x
topology: tpu7x:2x2x1
jax: 0.10.0
libtpu: 0.0.40
codegen_flags: <defaults>
</compile_context>

<pallas_src>
import math

import numpy as np

import jax
import jax.numpy as jnp
from jax.experimental import pallas as pl
from jax.experimental.pallas import tpu as pltpu

# ----------------------------------------------------------------------------
# Synthetic ontology (what nn_model.__init__ would compute from the DAG).
# ----------------------------------------------------------------------------
GENES = [f"G{i}" for i in range(16)]
G = len(GENES)                       # number of input genes
B = 8                                # batch size
TH = 6                               # self.term_hiddens
BN_EPS = 1e-5

term_gene_dict = {
    "T0": GENES[0:5],
    "T1": GENES[4:9],
    "T2": GENES[8:13],
    "T3": GENES[12:16],
    "T4": GENES[2:5],
}
term_neighbor_dict = {
    "T0": [], "T1": [], "T2": [], "T3": [],
    "T4": ["T0", "T1"],
    "T5": ["T2", "T3"],
    "T6": ["T4", "T5"],
}
term_layer_list = [["T0", "T1", "T2", "T3"], ["T4", "T5"], ["T6"]]
TOP_INPUT_LEN = 1 * TH               # one root term * term_hiddens

L0, L1, L2 = term_layer_list

_gene_off = {}
_o = 0
for _t, _gl in term_gene_dict.items():
    _gene_off[_t] = _o
    _o += len(_gl)
GENE_W = _o                          # 22 concatenated gene-layer columns

L0_OFF = {t: TH * j for j, t in enumerate(L0)}
L1_OFF = {t: TH * j for j, t in enumerate(L1)}
L2_OFF = {t: TH * j for j, t in enumerate(L2)}
L0_W, L1_W, L2_W = TH * len(L0), TH * len(L1), TH * len(L2)   # 24, 12, 6

AUX_ORDER = L0 + L1 + L2 + ["final"]
N_AUX = len(AUX_ORDER)               # 8

# ----------------------------------------------------------------------------
# Packed-slab layouts (all offsets static and sublane-aligned).
# ----------------------------------------------------------------------------
# bf16 fuse-stack weight slab (rows 16-aligned for the bf16 (16,128) tile).
R_WP, R_W0, R_W1, R_W2, R_WFO = 0, 16, 32, 160, 416
W16_ROWS, W16_COLS = 544, 256

# f32 ontology / aux weight slab (rows 8-aligned for the f32 (8,128) tile).
R_WG, R_WL0, R_WL1, R_WL2, R_WT, R_WA = 0, 16, 40, 120, 136, 144
W32_ROWS, W32_COLS = 192, 128

# f32 bias / BN vector slab: one vector per row.
(V_BP, V_B0, V_G0, V_BE0, V_B1, V_G1, V_BE1, V_B2, V_G2, V_BE2, V_BFO,
 V_BG, V_BL0, V_GL0, V_BEL0, V_BL1, V_GL1, V_BEL1, V_BL2, V_GL2, V_BEL2,
 V_BT, V_GT, V_BET, V_BA1, V_WA2, V_BA2) = range(27)
VEC_ROWS, VEC_COLS = 32, 256

# Lane layout of the single (B, 128) output slab (also the in-kernel staging
# slab for the K-fused layer-1 and aux matmuls).
OUT_L0 = 0                           # l0 activations        [ 0, 24)
OUT_L1 = OUT_L0 + L0_W               # l1 activations        [24, 36)
OUT_L2 = OUT_L1 + L1_W               # l2 (root) activations [36, 42)
OUT_TOP = OUT_L2 + L2_W              # top-head activations  [42, 48)
OUT_AUX = OUT_TOP + TH               # 8 aux outputs         [48, 56)
OUT_GENE = OUT_AUX + N_AUX           # staged gene slab      [56, 78)
ACT_W = OUT_AUX                      # 48: aux-head K-fused input width
IN1_W = OUT_GENE + GENE_W            # 78: layer-1 K-fused input width
OUT_W = 128


# ----------------------------------------------------------------------------
# Fused Pallas kernel: whole forward pass in one invocation.
# ----------------------------------------------------------------------------
def _fused_kernel(x_ref, w16_ref, w32_ref, vec_ref, o_ref):
    f32, bf16 = jnp.float32, jnp.bfloat16

    def dot(a, b):
        return jnp.dot(a, b, preferred_element_type=f32)

    def vrow(r, n):
        return vec_ref[pl.ds(r, 1), pl.ds(0, n)]            # (1, n)

    def batchnorm(y, g_row, b_row, n):
        # PyTorch BatchNorm1d training mode (biased batch variance); gamma is
        # folded into the rsqrt scale so the apply is a single FMA per feature.
        mean = jnp.mean(y, axis=0, keepdims=True)
        var = jnp.mean((y - mean) ** 2, axis=0, keepdims=True)
        scale = jax.lax.rsqrt(var + BN_EPS) * vrow(g_row, n)
        return (y - mean) * scale + vrow(b_row, n)

    # Zero the whole output/staging slab once: pad lanes stay zero and the
    # K-fused reads below may safely cover not-yet-written lanes (their weight
    # rows are zero too).
    o_ref[...] = jnp.zeros((B, OUT_W), f32)

    # ---- pert/gene fuse stack: bf16 MXU matmuls, f32 elementwise ------------
    gene_in = x_ref[:, pl.ds(0, G)]
    pert_in = x_ref[:, pl.ds(G, G)].astype(bf16)
    wp = w16_ref[pl.ds(R_WP, G), pl.ds(0, G)]
    h = gene_in + dot(pert_in, wp) + vrow(V_BP, G)           # (B, G) f32

    for (row, k, n, vb, vg, vbe) in (
            (R_W0, G, 128, V_B0, V_G0, V_BE0),
            (R_W1, 128, 256, V_B1, V_G1, V_BE1),
            (R_W2, 256, 128, V_B2, V_G2, V_BE2)):
        w = w16_ref[pl.ds(row, k), pl.ds(0, n)]
        y = dot(h.astype(bf16), w) + vrow(vb, n)
        h = jnp.maximum(batchnorm(y, vg, vbe, n), 0.0)

    wfo = w16_ref[pl.ds(R_WFO, 128), pl.ds(0, G)]
    gene_fuse = dot(h.astype(bf16), wfo) + vrow(V_BFO, G)    # (B, G) f32

    # ---- all per-term gene layers: one concatenated f32 matmul --------------
    wg = w32_ref[pl.ds(R_WG, G), pl.ds(0, GENE_W)]
    gene_slab = dot(gene_fuse, wg) + vrow(V_BG, GENE_W)      # (B, 22)
    o_ref[:, pl.ds(OUT_GENE, GENE_W)] = gene_slab            # stage for layer 1

    # ---- ontology layer 0 (leaf terms), block-diagonal weight ---------------
    wl0 = w32_ref[pl.ds(R_WL0, GENE_W), pl.ds(0, L0_W)]
    l0 = batchnorm(jnp.tanh(dot(gene_slab, wl0) + vrow(V_BL0, L0_W)),
                   V_GL0, V_BEL0, L0_W)                      # (B, 24)
    o_ref[:, pl.ds(OUT_L0, L0_W)] = l0

    # ---- ontology layer 1: children + gene inputs in ONE K-fused dot --------
    wl1 = w32_ref[pl.ds(R_WL1, IN1_W), pl.ds(0, L1_W)]
    in1 = o_ref[:, pl.ds(0, IN1_W)]                          # (B, 78)
    l1 = batchnorm(jnp.tanh(dot(in1, wl1) + vrow(V_BL1, L1_W)),
                   V_GL1, V_BEL1, L1_W)                      # (B, 12)
    o_ref[:, pl.ds(OUT_L1, L1_W)] = l1

    # ---- ontology layer 2 (root term) ----------------------------------------
    wl2 = w32_ref[pl.ds(R_WL2, L1_W), pl.ds(0, L2_W)]
    l2 = batchnorm(jnp.tanh(dot(l1, wl2) + vrow(V_BL2, L2_W)),
                   V_GL2, V_BEL2, L2_W)                      # (B, 6)
    o_ref[:, pl.ds(OUT_L2, L2_W)] = l2

    # ---- top head -------------------------------------------------------------
    wt = w32_ref[pl.ds(R_WT, L2_W), pl.ds(0, TH)]
    lt = batchnorm(jnp.tanh(dot(l2, wt) + vrow(V_BT, TH)),
                   V_GT, V_BET, TH)                          # (B, 6)
    o_ref[:, pl.ds(OUT_TOP, TH)] = lt

    # ---- all 8 aux heads: one K-fused dot; Linear(1,1) folded into a VPU FMA --
    wa = w32_ref[pl.ds(R_WA, ACT_W), pl.ds(0, N_AUX)]
    act = o_ref[:, pl.ds(0, ACT_W)]                          # (B, 48) = l0|l1|l2|lt
    a1 = jnp.tanh(dot(act, wa) + vrow(V_BA1, N_AUX))
    aux = a1 * vrow(V_WA2, N_AUX) + vrow(V_BA2, N_AUX)       # (B, 8)
    o_ref[:, pl.ds(OUT_AUX, N_AUX)] = aux


# ----------------------------------------------------------------------------
# Deterministic per-module parameter construction (mirrors nn.Linear init).
# ----------------------------------------------------------------------------
def _init_linear(key, fan_in, fan_out):
    k1, k2 = jax.random.split(key)
    bound = 1.0 / math.sqrt(fan_in)
    w = jax.random.uniform(k1, (fan_in, fan_out), jnp.float32, -bound, bound)
    b = jax.random.uniform(k2, (1, fan_out), jnp.float32, -bound, bound)
    return w, b


def _init_bn(n):
    return jnp.ones((1, n), jnp.float32), jnp.zeros((1, n), jnp.float32)


def build_params(seed=0):
    key = jax.random.PRNGKey(seed)
    params = {}

    def nk():
        nonlocal key
        key, sub = jax.random.split(key)
        return sub

    # gene/pert fuse stack
    params["pert_linear"] = _init_linear(nk(), G, G)
    dims = [G, 128, 256, 128]
    for i in range(3):
        params[f"pert_gene_linear{i}"] = _init_linear(nk(), dims[i], dims[i + 1])
        params[f"pert_gene_batch{i}"] = _init_bn(dims[i + 1])
    params["pert_gene_linear_out"] = _init_linear(nk(), 128, G)

    # per-term gene layers
    for t, glist in term_gene_dict.items():
        params[t + "_gene_layer"] = _init_linear(nk(), G, len(glist))

    # term graph layers
    for layer in term_layer_list:
        for t in layer:
            input_len = len(term_neighbor_dict[t]) * TH
            if t in term_gene_dict:
                input_len += len(term_gene_dict[t])
            params[t + "_linear"] = _init_linear(nk(), input_len, TH)
            params[t + "_bn"] = _init_bn(TH)
            params[t + "_aux1"] = _init_linear(nk(), TH, 1)
            params[t + "_aux2"] = _init_linear(nk(), 1, 1)

    # top layers
    params["top_linear"] = _init_linear(nk(), TOP_INPUT_LEN, TH)
    params["top_bn"] = _init_bn(TH)
    params["top_aux"] = _init_linear(nk(), TH, 1)
    params["top_out"] = _init_linear(nk(), 1, 1)
    return params


# ----------------------------------------------------------------------------
# Host-side packing: per-term params -> three contiguous slabs. Done once.
# (BatchNorm is per-feature, so concatenation preserves it exactly.)
# ----------------------------------------------------------------------------
def pack_params(params):
    npf = np.float32

    def A(x):
        return np.asarray(x, npf)

    w16 = np.zeros((W16_ROWS, W16_COLS), npf)
    w32 = np.zeros((W32_ROWS, W32_COLS), npf)
    vec = np.zeros((VEC_ROWS, VEC_COLS), npf)

    # --- bf16 fuse-stack weight slab ------------------------------------------
    for row, name in ((R_WP, "pert_linear"),
                      (R_W0, "pert_gene_linear0"),
                      (R_W1, "pert_gene_linear1"),
                      (R_W2, "pert_gene_linear2"),
                      (R_WFO, "pert_gene_linear_out")):
        w = A(params[name][0])
        w16[row:row + w.shape[0], :w.shape[1]] = w

    # --- f32 ontology/aux weight slab -----------------------------------------
    # (a) per-term gene layers, concatenated along output columns
    for t, glist in term_gene_dict.items():
        c = _gene_off[t]
        w32[R_WG:R_WG + G, c:c + len(glist)] = A(params[t + "_gene_layer"][0])
    # (b) layer 0: block-diagonal (gene slab -> leaf terms)
    for t in L0:
        r, n, c = _gene_off[t], len(term_gene_dict[t]), L0_OFF[t]
        w32[R_WL0 + r:R_WL0 + r + n, c:c + TH] = A(params[t + "_linear"][0])
    # (c) layer 1: K-stacked against the (B, IN1_W) staging-slab read
    for t in L1:
        w = A(params[t + "_linear"][0])
        c, r = L1_OFF[t], 0
        for child in term_neighbor_dict[t]:
            ro = R_WL1 + OUT_L0 + L0_OFF[child]
            w32[ro:ro + TH, c:c + TH] = w[r:r + TH, :]
            r += TH
        if t in term_gene_dict:
            n = len(term_gene_dict[t])
            ro = R_WL1 + OUT_GENE + _gene_off[t]
            w32[ro:ro + n, c:c + TH] = w[r:r + n, :]
    # (d) layer 2 (root): children read from the layer-1 slab
    for t in L2:
        w = A(params[t + "_linear"][0])
        c, r = L2_OFF[t], 0
        for child in term_neighbor_dict[t]:
            ro = R_WL2 + L1_OFF[child]
            w32[ro:ro + TH, c:c + TH] = w[r:r + TH, :]
            r += TH
    # (e) top head
    w32[R_WT:R_WT + TOP_INPUT_LEN, 0:TH] = A(params["top_linear"][0])
    # (f) aux heads: K-stacked against the (B, ACT_W) activation-slab read,
    #     with the trailing Linear(1,1) folded into per-column scale/bias rows.
    aux_off = {}
    for t in L0:
        aux_off[t] = OUT_L0 + L0_OFF[t]
    for t in L1:
        aux_off[t] = OUT_L1 + L1_OFF[t]
    for t in L2:
        aux_off[t] = OUT_L2 + L2_OFF[t]
    aux_off["final"] = OUT_TOP
    for k, t in enumerate(AUX_ORDER):
        if t == "final":
            w1, b1 = params["top_aux"]
            w2, b2 = params["top_out"]
        else:
            w1, b1 = params[t + "_aux1"]
            w2, b2 = params[t + "_aux2"]
        ro = R_WA + aux_off[t]
        w32[ro:ro + TH, k:k + 1] = A(w1)
        vec[V_BA1, k] = float(np.asarray(b1).reshape(-1)[0])
        vec[V_WA2, k] = float(np.asarray(w2).reshape(-1)[0])
        vec[V_BA2, k] = float(np.asarray(b2).reshape(-1)[0])

    # --- f32 bias / BN vector slab ---------------------------------------------
    def putv(row, v):
        v = A(v).reshape(-1)
        vec[row, :v.shape[0]] = v

    putv(V_BP, params["pert_linear"][1])
    for i, (vb, vg, vbe) in enumerate(((V_B0, V_G0, V_BE0),
                                       (V_B1, V_G1, V_BE1),
                                       (V_B2, V_G2, V_BE2))):
        putv(vb, params[f"pert_gene_linear{i}"][1])
        putv(vg, params[f"pert_gene_batch{i}"][0])
        putv(vbe, params[f"pert_gene_batch{i}"][1])
    putv(V_BFO, params["pert_gene_linear_out"][1])
    putv(V_BG, np.concatenate([A(params[t + "_gene_layer"][1]).reshape(-1)
                               for t in term_gene_dict]))
    putv(V_BL0, np.concatenate([A(params[t + "_linear"][1]).reshape(-1) for t in L0]))
    putv(V_GL0, np.concatenate([A(params[t + "_bn"][0]).reshape(-1) for t in L0]))
    putv(V_BEL0, np.concatenate([A(params[t + "_bn"][1]).reshape(-1) for t in L0]))
    putv(V_BL1, np.concatenate([A(params[t + "_linear"][1]).reshape(-1) for t in L1]))
    putv(V_GL1, np.concatenate([A(params[t + "_bn"][0]).reshape(-1) for t in L1]))
    putv(V_BEL1, np.concatenate([A(params[t + "_bn"][1]).reshape(-1) for t in L1]))
    putv(V_BL2, np.concatenate([A(params[t + "_linear"][1]).reshape(-1) for t in L2]))
    putv(V_GL2, np.concatenate([A(params[t + "_bn"][0]).reshape(-1) for t in L2]))
    putv(V_BEL2, np.concatenate([A(params[t + "_bn"][1]).reshape(-1) for t in L2]))
    putv(V_BT, params["top_linear"][1])
    putv(V_GT, params["top_bn"][0])
    putv(V_BET, params["top_bn"][1])

    return (jnp.asarray(w16, jnp.bfloat16),
            jnp.asarray(w32, jnp.float32),
            jnp.asarray(vec, jnp.float32))


# ----------------------------------------------------------------------------
# Forward pass: one pallas_call for the whole model, plain-JAX slicing after.
# ----------------------------------------------------------------------------
@jax.jit
def forward(w16, w32, vecs, x):
    out = pl.pallas_call(
        _fused_kernel,
        out_shape=jax.ShapeDtypeStruct((B, OUT_W), jnp.float32),
        in_specs=[pl.BlockSpec(memory_space=pltpu.MemorySpace.VMEM)] * 4,
        out_specs=pl.BlockSpec(memory_space=pltpu.MemorySpace.VMEM),
    )(x, w16, w32, vecs)

    nn_output, top_output, aux_output = {}, {}, {}
    for t in L0:
        c = OUT_L0 + L0_OFF[t]
        nn_output[t] = out[:, c:c + TH]
    for t in L1:
        c = OUT_L1 + L1_OFF[t]
        nn_output[t] = out[:, c:c + TH]
    for t in L2:
        c = OUT_L2 + L2_OFF[t]
        top_output[t] = out[:, c:c + TH]
    top_output["final"] = out[:, OUT_TOP:OUT_TOP + TH]
    for k, t in enumerate(AUX_ORDER):
        aux_output[t] = out[:, OUT_AUX + k:OUT_AUX + k + 1]
    return aux_output, nn_output, top_output


# ----------------------------------------------------------------------------
if __name__ == "__main__":
    params = build_params(seed=0)
    w16, w32, vecs = pack_params(params)
    x = jax.random.normal(jax.random.PRNGKey(0), (B, 2 * G), jnp.float32)

    aux_out, nn_out, top_out = forward(w16, w32, vecs, x)
    jax.block_until_ready(aux_out["final"])
    jax.block_until_ready(top_out["final"])

    assert aux_out["final"].shape == (B, 1)
    assert top_out["final"].shape == (B, TH)
    for t in term_layer_list[-1]:
        assert top_out[t].shape == (B, TH)
    for t in term_layer_list[0] + term_layer_list[1]:
        assert nn_out[t].shape == (B, TH)
    for t in AUX_ORDER[:-1]:
        assert aux_out[t].shape == (B, 1)
    assert bool(jnp.all(jnp.isfinite(aux_out["final"])))
    print("KERNEL_OK")
</pallas_src>

<mosaic_0001>
module attributes {stable_mosaic.version = 11 : i64} {
  func.func @_fused_kernel(%arg0: memref<8x32xf32, #tpu.memory_space<vmem>>, %arg1: memref<544x256xbf16, #tpu.memory_space<vmem>>, %arg2: memref<192x128xf32, #tpu.memory_space<vmem>>, %arg3: memref<32x256xf32, #tpu.memory_space<vmem>>, %arg4: memref<8x128xf32, #tpu.memory_space<vmem>>) attributes {dimension_semantics = [], scalar_prefetch = 0 : i64, scratch_operands = 0 : i64, tpu.core_type = #tpu.core_type<tc>} {
    %cst = arith.constant 0.000000e+00 : f32
    %0 = vector.broadcast %cst : f32 to vector<8x128xf32>
    %c0 = arith.constant 0 : index
    %c0_0 = arith.constant 0 : index
    %1 = vector.load %arg4[%c0, %c0_0] : memref<8x128xf32, #tpu.memory_space<vmem>>, vector<8x128xf32>
    tpu.vector_store %arg4[%c0, %c0_0], %0 {strides = array<i32>} : memref<8x128xf32, #tpu.memory_space<vmem>>, vector<8x128xf32>,
    %c0_1 = arith.constant 0 : index
    %c0_2 = arith.constant 0 : index
    %2 = vector.load %arg0[%c0_1, %c0_2] : memref<8x32xf32, #tpu.memory_space<vmem>>, vector<8x16xf32>
    %c0_3 = arith.constant 0 : index
    %c16 = arith.constant 16 : index
    %3 = vector.load %arg0[%c0_3, %c16] : memref<8x32xf32, #tpu.memory_space<vmem>>, vector<8x16xf32>
    %4 = arith.truncf %3 : vector<8x16xf32> to vector<8x16xbf16>
    %c0_4 = arith.constant 0 : index
    %c0_5 = arith.constant 0 : index
    %5 = vector.load %arg1[%c0_4, %c0_5] : memref<544x256xbf16, #tpu.memory_space<vmem>>, vector<16x16xbf16>
    %cst_6 = arith.constant dense<0.000000e+00> : vector<8x16xf32>
    %6 = tpu.matmul %4, %5, %cst_6 {dimension_numbers = #tpu.dot_dimension_numbers<[1], [0], [0], [1], [0, 0, 1, 1], [], []>} : vector<8x16xbf16>, vector<16x16xbf16>, vector<8x16xf32> -> vector<8x16xf32>
    %7 = arith.addf %2, %6 : vector<8x16xf32>
    %c0_7 = arith.constant 0 : index
    %c0_8 = arith.constant 0 : index
    %8 = vector.load %arg3[%c0_7, %c0_8] : memref<32x256xf32, #tpu.memory_space<vmem>>, vector<1x16xf32>
    %9 = vector.broadcast %8 : vector<1x16xf32> to vector<8x16xf32>
    %10 = arith.addf %7, %9 : vector<8x16xf32>
    %c16_9 = arith.constant 16 : index
    %c0_10 = arith.constant 0 : index
    %11 = vector.load %arg1[%c16_9, %c0_10] : memref<544x256xbf16, #tpu.memory_space<vmem>>, vector<16x128xbf16>
    %12 = arith.truncf %10 : vector<8x16xf32> to vector<8x16xbf16>
    %cst_11 = arith.constant dense<0.000000e+00> : vector<8x128xf32>
    %13 = tpu.matmul %12, %11, %cst_11 {dimension_numbers = #tpu.dot_dimension_numbers<[1], [0], [0], [1], [0, 0, 1, 1], [], []>} : vector<8x16xbf16>, vector<16x128xbf16>, vector<8x128xf32> -> vector<8x128xf32>
    %c1 = arith.constant 1 : index
    %c0_12 = arith.constant 0 : index
    %14 = vector.load %arg3[%c1, %c0_12] : memref<32x256xf32, #tpu.memory_space<vmem>>, vector<1x128xf32>
    %15 = vector.broadcast %14 : vector<1x128xf32> to vector<8x128xf32>
    %16 = arith.addf %13, %15 : vector<8x128xf32>
    %cst_13 = arith.constant dense<0.000000e+00> : vector<128xf32>
    %17 = vector.multi_reduction <add>, %16, %cst_13 [0] : vector<8x128xf32> to vector<128xf32>
    %18 = vector.shape_cast %17 : vector<128xf32> to vector<1x128xf32>
    %cst_14 = arith.constant 8.000000e+00 : f32
    %19 = vector.broadcast %cst_14 : f32 to vector<1x128xf32>
    %20 = arith.divf %18, %19 : vector<1x128xf32>
    %21 = vector.broadcast %20 : vector<1x128xf32> to vector<8x128xf32>
    %22 = arith.subf %16, %21 : vector<8x128xf32>
    %23 = arith.mulf %22, %22 : vector<8x128xf32>
    %cst_15 = arith.constant dense<0.000000e+00> : vector<128xf32>
    %24 = vector.multi_reduction <add>, %23, %cst_15 [0] : vector<8x128xf32> to vector<128xf32>
    %25 = vector.shape_cast %24 : vector<128xf32> to vector<1x128xf32>
    %cst_16 = arith.constant 8.000000e+00 : f32
    %26 = vector.broadcast %cst_16 : f32 to vector<1x128xf32>
    %27 = arith.divf %25, %26 : vector<1x128xf32>
    %cst_17 = arith.constant 9.99999974E-6 : f32
    %28 = vector.broadcast %cst_17 : f32 to vector<1x128xf32>
    %29 = arith.addf %27, %28 : vector<1x128xf32>
    %30 = math.rsqrt %29 : vector<1x128xf32>
    %c2 = arith.constant 2 : index
    %c0_18 = arith.constant 0 : index
    %31 = vector.load %arg3[%c2, %c0_18] : memref<32x256xf32, #tpu.memory_space<vmem>>, vector<1x128xf32>
    %32 = arith.mulf %30, %31 : vector<1x128xf32>
    %33 = vector.broadcast %20 : vector<1x128xf32> to vector<8x128xf32>
    %34 = arith.subf %16, %33 : vector<8x128xf32>
    %35 = vector.broadcast %32 : vector<1x128xf32> to vector<8x128xf32>
    %36 = arith.mulf %34, %35 : vector<8x128xf32>
    %c3 = arith.constant 3 : index
    %c0_19 = arith.constant 0 : index
    %37 = vector.load %arg3[%c3, %c0_19] : memref<32x256xf32, #tpu.memory_space<vmem>>, vector<1x128xf32>
    %38 = vector.broadcast %37 : vector<1x128xf32> to vector<8x128xf32>
    %39 = arith.addf %36, %38 : vector<8x128xf32>
    %cst_20 = arith.constant 0.000000e+00 : f32
    %40 = vector.broadcast %cst_20 : f32 to vector<8x128xf32>
    %41 = arith.maximumf %39, %40 : vector<8x128xf32>
    %c32 = arith.constant 32 : index
    %c0_21 = arith.constant 0 : index
    %42 = vector.load %arg1[%c32, %c0_21] : memref<544x256xbf16, #tpu.memory_space<vmem>>, vector<128x256xbf16>
    %43 = arith.truncf %41 : vector<8x128xf32> to vector<8x128xbf16>
    %cst_22 = arith.constant dense<0.000000e+00> : vector<8x256xf32>
    %44 = tpu.matmul %43, %42, %cst_22 {dimension_numbers = #tpu.dot_dimension_numbers<[1], [0], [0], [1], [0, 0, 1, 1], [], []>} : vector<8x128xbf16>, vector<128x256xbf16>, vector<8x256xf32> -> vector<8x256xf32>
    %c4 = arith.constant 4 : index
    %c0_23 = arith.constant 0 : index
    %45 = vector.load %arg3[%c4, %c0_23] : memref<32x256xf32, #tpu.memory_space<vmem>>, vector<1x256xf32>
    %46 = vector.broadcast %45 : vector<1x256xf32> to vector<8x256xf32>
    %47 = arith.addf %44, %46 : vector<8x256xf32>
    %cst_24 = arith.constant dense<0.000000e+00> : vector<256xf32>
    %48 = vector.multi_reduction <add>, %47, %cst_24 [0] : vector<8x256xf32> to vector<256xf32>
    %49 = vector.shape_cast %48 : vector<256xf32> to vector<1x256xf32>
    %cst_25 = arith.constant 8.000000e+00 : f32
    %50 = vector.broadcast %cst_25 : f32 to vector<1x256xf32>
    %51 = arith.divf %49, %50 : vector<1x256xf32>
    %52 = vector.broadcast %51 : vector<1x256xf32> to vector<8x256xf32>
    %53 = arith.subf %47, %52 : vector<8x256xf32>
    %54 = arith.mulf %53, %53 : vector<8x256xf32>
    %cst_26 = arith.constant dense<0.000000e+00> : vector<256xf32>
    %55 = vector.multi_reduction <add>, %54, %cst_26 [0] : vector<8x256xf32> to vector<256xf32>
    %56 = vector.shape_cast %55 : vector<256xf32> to vector<1x256xf32>
    %cst_27 = arith.constant 8.000000e+00 : f32
    %57 = vector.broadcast %cst_27 : f32 to vector<1x256xf32>
    %58 = arith.divf %56, %57 : vector<1x256xf32>
    %cst_28 = arith.constant 9.99999974E-6 : f32
    %59 = vector.broadcast %cst_28 : f32 to vector<1x256xf32>
    %60 = arith.addf %58, %59 : vector<1x256xf32>
    %61 = math.rsqrt %60 : vector<1x256xf32>
    %c5 = arith.constant 5 : index
    %c0_29 = arith.constant 0 : index
    %62 = vector.load %arg3[%c5, %c0_29] : memref<32x256xf32, #tpu.memory_space<vmem>>, vector<1x256xf32>
    %63 = arith.mulf %61, %62 : vector<1x256xf32>
    %64 = vector.broadcast %51 : vector<1x256xf32> to vector<8x256xf32>
    %65 = arith.subf %47, %64 : vector<8x256xf32>
    %66 = vector.broadcast %63 : vector<1x256xf32> to vector<8x256xf32>
    %67 = arith.mulf %65, %66 : vector<8x256xf32>
    %c6 = arith.constant 6 : index
    %c0_30 = arith.constant 0 : index
    %68 = vector.load %arg3[%c6, %c0_30] : memref<32x256xf32, #tpu.memory_space<vmem>>, vector<1x256xf32>
    %69 = vector.broadcast %68 : vector<1x256xf32> to vector<8x256xf32>
    %70 = arith.addf %67, %69 : vector<8x256xf32>
    %cst_31 = arith.constant 0.000000e+00 : f32
    %71 = vector.broadcast %cst_31 : f32 to vector<8x256xf32>
    %72 = arith.maximumf %70, %71 : vector<8x256xf32>
    %c160 = arith.constant 160 : index
    %c0_32 = arith.constant 0 : index
    %73 = vector.load %arg1[%c160, %c0_32] : memref<544x256xbf16, #tpu.memory_space<vmem>>, vector<256x128xbf16>
    %74 = arith.truncf %72 : vector<8x256xf32> to vector<8x256xbf16>
    %cst_33 = arith.constant dense<0.000000e+00> : vector<8x128xf32>
    %75 = tpu.matmul %74, %73, %cst_33 {dimension_numbers = #tpu.dot_dimension_numbers<[1], [0], [0], [1], [0, 0, 1, 1], [], []>} : vector<8x256xbf16>, vector<256x128xbf16>, vector<8x128xf32> -> vector<8x128xf32>
    %c7 = arith.constant 7 : index
    %c0_34 = arith.constant 0 : index
    %76 = vector.load %arg3[%c7, %c0_34] : memref<32x256xf32, #tpu.memory_space<vmem>>, vector<1x128xf32>
    %77 = vector.broadcast %76 : vector<1x128xf32> to vector<8x128xf32>
    %78 = arith.addf %75, %77 : vector<8x128xf32>
    %cst_35 = arith.constant dense<0.000000e+00> : vector<128xf32>
    %79 = vector.multi_reduction <add>, %78, %cst_35 [0] : vector<8x128xf32> to vector<128xf32>
    %80 = vector.shape_cast %79 : vector<128xf32> to vector<1x128xf32>
    %cst_36 = arith.constant 8.000000e+00 : f32
    %81 = vector.broadcast %cst_36 : f32 to vector<1x128xf32>
    %82 = arith.divf %80, %81 : vector<1x128xf32>
    %83 = vector.broadcast %82 : vector<1x128xf32> to vector<8x128xf32>
    %84 = arith.subf %78, %83 : vector<8x128xf32>
    %85 = arith.mulf %84, %84 : vector<8x128xf32>
    %cst_37 = arith.constant dense<0.000000e+00> : vector<128xf32>
    %86 = vector.multi_reduction <add>, %85, %cst_37 [0] : vector<8x128xf32> to vector<128xf32>
    %87 = vector.shape_cast %86 : vector<128xf32> to vector<1x128xf32>
    %cst_38 = arith.constant 8.000000e+00 : f32
    %88 = vector.broadcast %cst_38 : f32 to vector<1x128xf32>
    %89 = arith.divf %87, %88 : vector<1x128xf32>
    %cst_39 = arith.constant 9.99999974E-6 : f32
    %90 = vector.broadcast %cst_39 : f32 to vector<1x128xf32>
    %91 = arith.addf %89, %90 : vector<1x128xf32>
    %92 = math.rsqrt %91 : vector<1x128xf32>
    %c8 = arith.constant 8 : index
    %c0_40 = arith.constant 0 : index
    %93 = vector.load %arg3[%c8, %c0_40] : memref<32x256xf32, #tpu.memory_space<vmem>>, vector<1x128xf32>
    %94 = arith.mulf %92, %93 : vector<1x128xf32>
    %95 = vector.broadcast %82 : vector<1x128xf32> to vector<8x128xf32>
    %96 = arith.subf %78, %95 : vector<8x128xf32>
    %97 = vector.broadcast %94 : vector<1x128xf32> to vector<8x128xf32>
    %98 = arith.mulf %96, %97 : vector<8x128xf32>
    %c9 = arith.constant 9 : index
    %c0_41 = arith.constant 0 : index
    %99 = vector.load %arg3[%c9, %c0_41] : memref<32x256xf32, #tpu.memory_space<vmem>>, vector<1x128xf32>
    %100 = vector.broadcast %99 : vector<1x128xf32> to vector<8x128xf32>
    %101 = arith.addf %98, %100 : vector<8x128xf32>
    %cst_42 = arith.constant 0.000000e+00 : f32
    %102 = vector.broadcast %cst_42 : f32 to vector<8x128xf32>
    %103 = arith.maximumf %101, %102 : vector<8x128xf32>
    %c416 = arith.constant 416 : index
    %c0_43 = arith.constant 0 : index
    %104 = vector.load %arg1[%c416, %c0_43] : memref<544x256xbf16, #tpu.memory_space<vmem>>, vector<128x16xbf16>
    %105 = arith.truncf %103 : vector<8x128xf32> to vector<8x128xbf16>
    %cst_44 = arith.constant dense<0.000000e+00> : vector<8x16xf32>
    %106 = tpu.matmul %105, %104, %cst_44 {dimension_numbers = #tpu.dot_dimension_numbers<[1], [0], [0], [1], [0, 0, 1, 1], [], []>} : vector<8x128xbf16>, vector<128x16xbf16>, vector<8x16xf32> -> vector<8x16xf32>
    %c10 = arith.constant 10 : index
    %c0_45 = arith.constant 0 : index
    %107 = vector.load %arg3[%c10, %c0_45] : memref<32x256xf32, #tpu.memory_space<vmem>>, vector<1x16xf32>
    %108 = vector.broadcast %107 : vector<1x16xf32> to vector<8x16xf32>
    %109 = arith.addf %106, %108 : vector<8x16xf32>
    %c0_46 = arith.constant 0 : index
    %c0_47 = arith.constant 0 : index
    %110 = vector.load %arg2[%c0_46, %c0_47] : memref<192x128xf32, #tpu.memory_space<vmem>>, vector<16x22xf32>
    %cst_48 = arith.constant dense<0.000000e+00> : vector<8x22xf32>
    %111 = tpu.matmul %109, %110, %cst_48 {dimension_numbers = #tpu.dot_dimension_numbers<[1], [0], [0], [1], [0, 0, 1, 1], [], []>} : vector<8x16xf32>, vector<16x22xf32>, vector<8x22xf32> -> vector<8x22xf32>
    %c11 = arith.constant 11 : index
    %c0_49 = arith.constant 0 : index
    %112 = vector.load %arg3[%c11, %c0_49] : memref<32x256xf32, #tpu.memory_space<vmem>>, vector<1x22xf32>
    %113 = vector.broadcast %112 : vector<1x22xf32> to vector<8x22xf32>
    %114 = arith.addf %111, %113 : vector<8x22xf32>
    %c0_50 = arith.constant 0 : index
    %c56 = arith.constant 56 : index
    %115 = vector.load %arg4[%c0_50, %c56] : memref<8x128xf32, #tpu.memory_space<vmem>>, vector<8x22xf32>
    tpu.vector_store %arg4[%c0_50, %c56], %114 {strides = array<i32>} : memref<8x128xf32, #tpu.memory_space<vmem>>, vector<8x22xf32>,
    %c16_51 = arith.constant 16 : index
    %c0_52 = arith.constant 0 : index
    %116 = vector.load %arg2[%c16_51, %c0_52] : memref<192x128xf32, #tpu.memory_space<vmem>>, vector<22x24xf32>
    %cst_53 = arith.constant dense<0.000000e+00> : vector<8x24xf32>
    %117 = tpu.matmul %114, %116, %cst_53 {dimension_numbers = #tpu.dot_dimension_numbers<[1], [0], [0], [1], [0, 0, 1, 1], [], []>} : vector<8x22xf32>, vector<22x24xf32>, vector<8x24xf32> -> vector<8x24xf32>
    %c12 = arith.constant 12 : index
    %c0_54 = arith.constant 0 : index
    %118 = vector.load %arg3[%c12, %c0_54] : memref<32x256xf32, #tpu.memory_space<vmem>>, vector<1x24xf32>
    %119 = vector.broadcast %118 : vector<1x24xf32> to vector<8x24xf32>
    %120 = arith.addf %117, %119 : vector<8x24xf32>
    %121 = math.tanh %120 : vector<8x24xf32>
    %cst_55 = arith.constant dense<0.000000e+00> : vector<24xf32>
    %122 = vector.multi_reduction <add>, %121, %cst_55 [0] : vector<8x24xf32> to vector<24xf32>
    %123 = vector.shape_cast %122 : vector<24xf32> to vector<1x24xf32>
    %cst_56 = arith.constant 8.000000e+00 : f32
    %124 = vector.broadcast %cst_56 : f32 to vector<1x24xf32>
    %125 = arith.divf %123, %124 : vector<1x24xf32>
    %126 = vector.broadcast %125 : vector<1x24xf32> to vector<8x24xf32>
    %127 = arith.subf %121, %126 : vector<8x24xf32>
    %128 = arith.mulf %127, %127 : vector<8x24xf32>
    %cst_57 = arith.constant dense<0.000000e+00> : vector<24xf32>
    %129 = vector.multi_reduction <add>, %128, %cst_57 [0] : vector<8x24xf32> to vector<24xf32>
    %130 = vector.shape_cast %129 : vector<24xf32> to vector<1x24xf32>
    %cst_58 = arith.constant 8.000000e+00 : f32
    %131 = vector.broadcast %cst_58 : f32 to vector<1x24xf32>
    %132 = arith.divf %130, %131 : vector<1x24xf32>
    %cst_59 = arith.constant 9.99999974E-6 : f32
    %133 = vector.broadcast %cst_59 : f32 to vector<1x24xf32>
    %134 = arith.addf %132, %133 : vector<1x24xf32>
    %135 = math.rsqrt %134 : vector<1x24xf32>
    %c13 = arith.constant 13 : index
    %c0_60 = arith.constant 0 : index
    %136 = vector.load %arg3[%c13, %c0_60] : memref<32x256xf32, #tpu.memory_space<vmem>>, vector<1x24xf32>
    %137 = arith.mulf %135, %136 : vector<1x24xf32>
    %138 = vector.broadcast %125 : vector<1x24xf32> to vector<8x24xf32>
    %139 = arith.subf %121, %138 : vector<8x24xf32>
    %140 = vector.broadcast %137 : vector<1x24xf32> to vector<8x24xf32>
    %141 = arith.mulf %139, %140 : vector<8x24xf32>
    %c14 = arith.constant 14 : index
    %c0_61 = arith.constant 0 : index
    %142 = vector.load %arg3[%c14, %c0_61] : memref<32x256xf32, #tpu.memory_space<vmem>>, vector<1x24xf32>
    %143 = vector.broadcast %142 : vector<1x24xf32> to vector<8x24xf32>
    %144 = arith.addf %141, %143 : vector<8x24xf32>
    %c0_62 = arith.constant 0 : index
    %c0_63 = arith.constant 0 : index
    %145 = vector.load %arg4[%c0_62, %c0_63] : memref<8x128xf32, #tpu.memory_space<vmem>>, vector<8x24xf32>
    tpu.vector_store %arg4[%c0_62, %c0_63], %144 {strides = array<i32>} : memref<8x128xf32, #tpu.memory_space<vmem>>, vector<8x24xf32>,
    %c40 = arith.constant 40 : index
    %c0_64 = arith.constant 0 : index
    %146 = vector.load %arg2[%c40, %c0_64] : memref<192x128xf32, #tpu.memory_space<vmem>>, vector<78x12xf32>
    %c0_65 = arith.constant 0 : index
    %c0_66 = arith.constant 0 : index
    %147 = vector.load %arg4[%c0_65, %c0_66] : memref<8x128xf32, #tpu.memory_space<vmem>>, vector<8x78xf32>
    %cst_67 = arith.constant dense<0.000000e+00> : vector<8x12xf32>
    %148 = tpu.matmul %147, %146, %cst_67 {dimension_numbers = #tpu.dot_dimension_numbers<[1], [0], [0], [1], [0, 0, 1, 1], [], []>} : vector<8x78xf32>, vector<78x12xf32>, vector<8x12xf32> -> vector<8x12xf32>
    %c15 = arith.constant 15 : index
    %c0_68 = arith.constant 0 : index
    %149 = vector.load %arg3[%c15, %c0_68] : memref<32x256xf32, #tpu.memory_space<vmem>>, vector<1x12xf32>
    %150 = vector.broadcast %149 : vector<1x12xf32> to vector<8x12xf32>
    %151 = arith.addf %148, %150 : vector<8x12xf32>
    %152 = math.tanh %151 : vector<8x12xf32>
    %cst_69 = arith.constant dense<0.000000e+00> : vector<12xf32>
    %153 = vector.multi_reduction <add>, %152, %cst_69 [0] : vector<8x12xf32> to vector<12xf32>
    %154 = vector.shape_cast %153 : vector<12xf32> to vector<1x12xf32>
    %cst_70 = arith.constant 8.000000e+00 : f32
    %155 = vector.broadcast %cst_70 : f32 to vector<1x12xf32>
    %156 = arith.divf %154, %155 : vector<1x12xf32>
    %157 = vector.broadcast %156 : vector<1x12xf32> to vector<8x12xf32>
    %158 = arith.subf %152, %157 : vector<8x12xf32>
    %159 = arith.mulf %158, %158 : vector<8x12xf32>
    %cst_71 = arith.constant dense<0.000000e+00> : vector<12xf32>
    %160 = vector.multi_reduction <add>, %159, %cst_71 [0] : vector<8x12xf32> to vector<12xf32>
    %161 = vector.shape_cast %160 : vector<12xf32> to vector<1x12xf32>
    %cst_72 = arith.constant 8.000000e+00 : f32
    %162 = vector.broadcast %cst_72 : f32 to vector<1x12xf32>
    %163 = arith.divf %161, %162 : vector<1x12xf32>
    %cst_73 = arith.constant 9.99999974E-6 : f32
    %164 = vector.broadcast %cst_73 : f32 to vector<1x12xf32>
    %165 = arith.addf %163, %164 : vector<1x12xf32>
    %166 = math.rsqrt %165 : vector<1x12xf32>
    %c16_74 = arith.constant 16 : index
    %c0_75 = arith.constant 0 : index
    %167 = vector.load %arg3[%c16_74, %c0_75] : memref<32x256xf32, #tpu.memory_space<vmem>>, vector<1x12xf32>
    %168 = arith.mulf %166, %167 : vector<1x12xf32>
    %169 = vector.broadcast %156 : vector<1x12xf32> to vector<8x12xf32>
    %170 = arith.subf %152, %169 : vector<8x12xf32>
    %171 = vector.broadcast %168 : vector<1x12xf32> to vector<8x12xf32>
    %172 = arith.mulf %170, %171 : vector<8x12xf32>
    %c17 = arith.constant 17 : index
    %c0_76 = arith.constant 0 : index
    %173 = vector.load %arg3[%c17, %c0_76] : memref<32x256xf32, #tpu.memory_space<vmem>>, vector<1x12xf32>
    %174 = vector.broadcast %173 : vector<1x12xf32> to vector<8x12xf32>
    %175 = arith.addf %172, %174 : vector<8x12xf32>
    %c0_77 = arith.constant 0 : index
    %c24 = arith.constant 24 : index
    %176 = vector.load %arg4[%c0_77, %c24] : memref<8x128xf32, #tpu.memory_space<vmem>>, vector<8x12xf32>
    tpu.vector_store %arg4[%c0_77, %c24], %175 {strides = array<i32>} : memref<8x128xf32, #tpu.memory_space<vmem>>, vector<8x12xf32>,
    %c120 = arith.constant 120 : index
    %c0_78 = arith.constant 0 : index
    %177 = vector.load %arg2[%c120, %c0_78] : memref<192x128xf32, #tpu.memory_space<vmem>>, vector<12x6xf32>
    %cst_79 = arith.constant dense<0.000000e+00> : vector<8x6xf32>
    %178 = tpu.matmul %175, %177, %cst_79 {dimension_numbers = #tpu.dot_dimension_numbers<[1], [0], [0], [1], [0, 0, 1, 1], [], []>} : vector<8x12xf32>, vector<12x6xf32>, vector<8x6xf32> -> vector<8x6xf32>
    %c18 = arith.constant 18 : index
    %c0_80 = arith.constant 0 : index
    %179 = vector.load %arg3[%c18, %c0_80] : memref<32x256xf32, #tpu.memory_space<vmem>>, vector<1x6xf32>
    %180 = vector.broadcast %179 : vector<1x6xf32> to vector<8x6xf32>
    %181 = arith.addf %178, %180 : vector<8x6xf32>
    %182 = math.tanh %181 : vector<8x6xf32>
    %cst_81 = arith.constant dense<0.000000e+00> : vector<6xf32>
    %183 = vector.multi_reduction <add>, %182, %cst_81 [0] : vector<8x6xf32> to vector<6xf32>
    %184 = vector.shape_cast %183 : vector<6xf32> to vector<1x6xf32>
    %cst_82 = arith.constant 8.000000e+00 : f32
    %185 = vector.broadcast %cst_82 : f32 to vector<1x6xf32>
    %186 = arith.divf %184, %185 : vector<1x6xf32>
    %187 = vector.broadcast %186 : vector<1x6xf32> to vector<8x6xf32>
    %188 = arith.subf %182, %187 : vector<8x6xf32>
    %189 = arith.mulf %188, %188 : vector<8x6xf32>
    %cst_83 = arith.constant dense<0.000000e+00> : vector<6xf32>
    %190 = vector.multi_reduction <add>, %189, %cst_83 [0] : vector<8x6xf32> to vector<6xf32>
    %191 = vector.shape_cast %190 : vector<6xf32> to vector<1x6xf32>
    %cst_84 = arith.constant 8.000000e+00 : f32
    %192 = vector.broadcast %cst_84 : f32 to vector<1x6xf32>
    %193 = arith.divf %191, %192 : vector<1x6xf32>
    %cst_85 = arith.constant 9.99999974E-6 : f32
    %194 = vector.broadcast %cst_85 : f32 to vector<1x6xf32>
    %195 = arith.addf %193, %194 : vector<1x6xf32>
    %196 = math.rsqrt %195 : vector<1x6xf32>
    %c19 = arith.constant 19 : index
    %c0_86 = arith.constant 0 : index
    %197 = vector.load %arg3[%c19, %c0_86] : memref<32x256xf32, #tpu.memory_space<vmem>>, vector<1x6xf32>
    %198 = arith.mulf %196, %197 : vector<1x6xf32>
    %199 = vector.broadcast %186 : vector<1x6xf32> to vector<8x6xf32>
    %200 = arith.subf %182, %199 : vector<8x6xf32>
    %201 = vector.broadcast %198 : vector<1x6xf32> to vector<8x6xf32>
    %202 = arith.mulf %200, %201 : vector<8x6xf32>
    %c20 = arith.constant 20 : index
    %c0_87 = arith.constant 0 : index
    %203 = vector.load %arg3[%c20, %c0_87] : memref<32x256xf32, #tpu.memory_space<vmem>>, vector<1x6xf32>
    %204 = vector.broadcast %203 : vector<1x6xf32> to vector<8x6xf32>
    %205 = arith.addf %202, %204 : vector<8x6xf32>
    %c0_88 = arith.constant 0 : index
    %c36 = arith.constant 36 : index
    %206 = vector.load %arg4[%c0_88, %c36] : memref<8x128xf32, #tpu.memory_space<vmem>>, vector<8x6xf32>
    tpu.vector_store %arg4[%c0_88, %c36], %205 {strides = array<i32>} : memref<8x128xf32, #tpu.memory_space<vmem>>, vector<8x6xf32>,
    %c136 = arith.constant 136 : index
    %c0_89 = arith.constant 0 : index
    %207 = vector.load %arg2[%c136, %c0_89] : memref<192x128xf32, #tpu.memory_space<vmem>>, vector<6x6xf32>
    %cst_90 = arith.constant dense<0.000000e+00> : vector<8x6xf32>
    %208 = tpu.matmul %205, %207, %cst_90 {dimension_numbers = #tpu.dot_dimension_numbers<[1], [0], [0], [1], [0, 0, 1, 1], [], []>} : vector<8x6xf32>, vector<6x6xf32>, vector<8x6xf32> -> vector<8x6xf32>
    %c21 = arith.constant 21 : index
    %c0_91 = arith.constant 0 : index
    %209 = vector.load %arg3[%c21, %c0_91] : memref<32x256xf32, #tpu.memory_space<vmem>>, vector<1x6xf32>
    %210 = vector.broadcast %209 : vector<1x6xf32> to vector<8x6xf32>
    %211 = arith.addf %208, %210 : vector<8x6xf32>
    %212 = math.tanh %211 : vector<8x6xf32>
    %cst_92 = arith.constant dense<0.000000e+00> : vector<6xf32>
    %213 = vector.multi_reduction <add>, %212, %cst_92 [0] : vector<8x6xf32> to vector<6xf32>
    %214 = vector.shape_cast %213 : vector<6xf32> to vector<1x6xf32>
    %cst_93 = arith.constant 8.000000e+00 : f32
    %215 = vector.broadcast %cst_93 : f32 to vector<1x6xf32>
    %216 = arith.divf %214, %215 : vector<1x6xf32>
    %217 = vector.broadcast %216 : vector<1x6xf32> to vector<8x6xf32>
    %218 = arith.subf %212, %217 : vector<8x6xf32>
    %219 = arith.mulf %218, %218 : vector<8x6xf32>
    %cst_94 = arith.constant dense<0.000000e+00> : vector<6xf32>
    %220 = vector.multi_reduction <add>, %219, %cst_94 [0] : vector<8x6xf32> to vector<6xf32>
    %221 = vector.shape_cast %220 : vector<6xf32> to vector<1x6xf32>
    %cst_95 = arith.constant 8.000000e+00 : f32
    %222 = vector.broadcast %cst_95 : f32 to vector<1x6xf32>
    %223 = arith.divf %221, %222 : vector<1x6xf32>
    %cst_96 = arith.constant 9.99999974E-6 : f32
    %224 = vector.broadcast %cst_96 : f32 to vector<1x6xf32>
    %225 = arith.addf %223, %224 : vector<1x6xf32>
    %226 = math.rsqrt %225 : vector<1x6xf32>
    %c22 = arith.constant 22 : index
    %c0_97 = arith.constant 0 : index
    %227 = vector.load %arg3[%c22, %c0_97] : memref<32x256xf32, #tpu.memory_space<vmem>>, vector<1x6xf32>
    %228 = arith.mulf %226, %227 : vector<1x6xf32>
    %229 = vector.broadcast %216 : vector<1x6xf32> to vector<8x6xf32>
    %230 = arith.subf %212, %229 : vector<8x6xf32>
    %231 = vector.broadcast %228 : vector<1x6xf32> to vector<8x6xf32>
    %232 = arith.mulf %230, %231 : vector<8x6xf32>
    %c23 = arith.constant 23 : index
    %c0_98 = arith.constant 0 : index
    %233 = vector.load %arg3[%c23, %c0_98] : memref<32x256xf32, #tpu.memory_space<vmem>>, vector<1x6xf32>
    %234 = vector.broadcast %233 : vector<1x6xf32> to vector<8x6xf32>
    %235 = arith.addf %232, %234 : vector<8x6xf32>
    %c0_99 = arith.constant 0 : index
    %c42 = arith.constant 42 : index
    %236 = vector.load %arg4[%c0_99, %c42] : memref<8x128xf32, #tpu.memory_space<vmem>>, vector<8x6xf32>
    tpu.vector_store %arg4[%c0_99, %c42], %235 {strides = array<i32>} : memref<8x128xf32, #tpu.memory_space<vmem>>, vector<8x6xf32>,
    %c144 = arith.constant 144 : index
    %c0_100 = arith.constant 0 : index
    %237 = vector.load %arg2[%c144, %c0_100] : memref<192x128xf32, #tpu.memory_space<vmem>>, vector<48x8xf32>
    %c0_101 = arith.constant 0 : index
    %c0_102 = arith.constant 0 : index
    %238 = vector.load %arg4[%c0_101, %c0_102] : memref<8x128xf32, #tpu.memory_space<vmem>>, vector<8x48xf32>
    %cst_103 = arith.constant dense<0.000000e+00> : vector<8x8xf32>
    %239 = tpu.matmul %238, %237, %cst_103 {dimension_numbers = #tpu.dot_dimension_numbers<[1], [0], [0], [1], [0, 0, 1, 1], [], []>} : vector<8x48xf32>, vector<48x8xf32>, vector<8x8xf32> -> vector<8x8xf32>
    %c24_104 = arith.constant 24 : index
    %c0_105 = arith.constant 0 : index
    %240 = vector.load %arg3[%c24_104, %c0_105] : memref<32x256xf32, #tpu.memory_space<vmem>>, vector<1x8xf32>
    %241 = vector.broadcast %240 : vector<1x8xf32> to vector<8x8xf32>
    %242 = arith.addf %239, %241 : vector<8x8xf32>
    %243 = math.tanh %242 : vector<8x8xf32>
    %c25 = arith.constant 25 : index
    %c0_106 = arith.constant 0 : index
    %244 = vector.load %arg3[%c25, %c0_106] : memref<32x256xf32, #tpu.memory_space<vmem>>, vector<1x8xf32>
    %245 = vector.broadcast %244 : vector<1x8xf32> to vector<8x8xf32>
    %246 = arith.mulf %243, %245 : vector<8x8xf32>
    %c26 = arith.constant 26 : index
    %c0_107 = arith.constant 0 : index
    %247 = vector.load %arg3[%c26, %c0_107] : memref<32x256xf32, #tpu.memory_space<vmem>>, vector<1x8xf32>
    %248 = vector.broadcast %247 : vector<1x8xf32> to vector<8x8xf32>
    %249 = arith.addf %246, %248 : vector<8x8xf32>
    %c0_108 = arith.constant 0 : index
    %c48 = arith.constant 48 : index
    %250 = vector.load %arg4[%c0_108, %c48] : memref<8x128xf32, #tpu.memory_space<vmem>>, vector<8x8xf32>
    tpu.vector_store %arg4[%c0_108, %c48], %249 {strides = array<i32>} : memref<8x128xf32, #tpu.memory_space<vmem>>, vector<8x8xf32>,
    return
  }
}

</mosaic_0001>

<llo_original>
// kernel: forward.1
$region0: #{forward.1}
  #allocation0 [shape = 'u32[]', space=smem, size = 0x4, offset = 0x4, fixed_abs, tag = 'smem constant byte address 0x4 - core index']
  #allocation1 [shape = 'u32[144,128]{1,0:T(1,128)}', space=vmem, size = 0x12000, scoped, tag = 'internal scratch']
  %s0 = inlined_call_operand.vmem [shape: f32[8,32], index: 0, kind: input, shape index: {}]
  %s1 = inlined_call_operand.hbm [shape: bf16[544,256], index: 1, kind: input, shape index: {}]
  %s2 = inlined_call_operand.hbm [shape: f32[192,128], index: 2, kind: input, shape index: {}]
  %s3 = inlined_call_operand.hbm [shape: f32[32,256], index: 3, kind: input, shape index: {}]
  %s4 = inlined_call_operand.vmem [shape: f32[8,128], index: 4, kind: output, shape index: {}]
  %s5 = sld [smem:[#allocation0]]
  $region38: #{forward.1} parent=0
    _
  %s7 = ssub.s32 1, %s5
  %s8 = scalar_select 0, %s7, %s5
  $region1: #{forward.1} parent=0
    #allocation2 [shape = 'u8[278528]{0}', space=vmem, size = 0x44000, scoped, tag = 'input window, operand 1, single buffered']
    #allocation3 [shape = 's32[1]{0}', space=sflag, size = 0x4, scoped, tag = 'scoped memory for forward.1']
    #allocation4 [shape = 'u8[98304]{0}', space=vmem, size = 0x18000, scoped, tag = 'input window, operand 2, single buffered']
    #allocation5 [shape = 's32[1]{0}', space=sflag, size = 0x4, scoped, tag = 'scoped memory for forward.1']
    #allocation6 [shape = 'u8[32768]{0}', space=vmem, size = 0x8000, scoped, tag = 'input window, operand 3, single buffered']
    %9 = vsyncpa [#allocation3], 0
    %10 = vsyncpa [#allocation5], 0
    // Predicated region
    $region2: #{forward.1} parent=1 // pred_check
      _
    $region3: #{forward.1} parent=1 // pred_check_branch
      %12 = sbr.rel (0) target = $region5
    $region4: #{forward.1} parent=1 // pred_region
      _
    $region5: #{forward.1} parent=1 // pred_fallthru
      _
    // Predicated region
    $region6: #{forward.1} parent=1 // pred_check
      _
    $region7: #{forward.1} parent=1 // pred_check_branch
      %14 = sbr.rel (0) target = $region9
    $region8: #{forward.1} parent=1 // pred_region
      %s16 = ssub.s32 8704, 8704
      %17 = vsyncadd [#allocation3], %s16
      %s18 = sshll.u32 [#allocation2], 4
      %s19 = int_to_ptr.vmem [resolvable:$true] %s18
      %24 = dma.hbm_to_vmem [thread:$0]  %s1, 8704, %s19, [#allocation3], 128, 128, 8
    $region9: #{forward.1} parent=1 // pred_fallthru
      _
    // Predicated region
    $region10: #{forward.1} parent=1 // pred_check
      _
    $region11: #{forward.1} parent=1 // pred_check_branch
      %26 = sbr.rel (0) target = $region13
    $region12: #{forward.1} parent=1 // pred_region
      %s28 = ssub.s32 3072, 3072
      %29 = vsyncadd [#allocation5], %s28
      %s30 = sshll.u32 [#allocation4], 4
      %s31 = int_to_ptr.vmem [resolvable:$true] %s30
      %36 = dma.hbm_to_vmem [thread:$0]  %s2, 3072, %s31, [#allocation5], 128, 128, 8
    $region13: #{forward.1} parent=1 // pred_fallthru
      _
    // Predicated region
    $region14: #{forward.1} parent=1 // pred_check
      _
    $region15: #{forward.1} parent=1 // pred_check_branch
      %38 = sbr.rel (0) target = $region17
    $region16: #{forward.1} parent=1 // pred_region
      %s40 = ssub.s32 1024, 1024
      %41 = vsyncadd [#allocation5], %s40
      %s42 = sshll.u32 [#allocation6], 4
      %s43 = int_to_ptr.vmem [resolvable:$true] %s42
      %48 = dma.hbm_to_vmem [thread:$0]  %s3, 1024, %s43, [#allocation5], 256, 256, 16
    $region17: #{forward.1} parent=1 // pred_fallthru
      _
    // Predicated region
    $region18: #{forward.1} parent=1 // pred_check
      _
    $region19: #{forward.1} parent=1 // pred_check_branch
      %50 = sbr.rel (0) target = $region21
    $region20: #{forward.1} parent=1 // pred_region
      %51 = dma.done [#allocation3], 8704
    $region21: #{forward.1} parent=1 // pred_fallthru
      _
    // Predicated region
    $region22: #{forward.1} parent=1 // pred_check
      _
    $region23: #{forward.1} parent=1 // pred_check_branch
      %53 = sbr.rel (0) target = $region25
    $region24: #{forward.1} parent=1 // pred_region
      %54 = dma.done [#allocation5], 3072
    $region25: #{forward.1} parent=1 // pred_fallthru
      _
    // Predicated region
    $region26: #{forward.1} parent=1 // pred_check
      _
    $region27: #{forward.1} parent=1 // pred_check_branch
      %56 = sbr.rel (0) target = $region29
    $region28: #{forward.1} parent=1 // pred_region
      %57 = dma.done [#allocation5], 1024
    $region29: #{forward.1} parent=1 // pred_fallthru
      _
    %59 = vst [vmem:[%s4] sm:$0xff] 0.0
    %v60 = vld [vmem:[%s0] sm:$0xff]
    %v61 = vpack.c.bf16 %v60, %v60
    %v62 = vld [vmem:[#allocation2] sm:$0xf]
    %v63 = vld [vmem:[#allocation2 + $0x8] sm:$0xf]
    %65 = vrot.lane.b32.xlu0 %v61, 112
    %v66 = vpop.permute.xlu0 %65
    %v69 = vunpack.c.l.b16 %v62
    %v70 = vunpack.c.l.b16 %v63
    %v71 = vpack.c.b16 %v70, %v69
    %vm73 = vcmask 130048
    %v75 = vsel %vm73, %v66, 0
    %77 = vmatprep.subr.bf16.mxu0 0
    %78 = vmatpush1.bf16.msra.mxu0 %v71
    %79 = vmatprep.subr.bf16.mxu0 0
    %80 = vmatpush1.bf16.msra.mxu0 0
    %81 = vmatprep.subr.bf16.mxu0 0
    %82 = vmatpush1.bf16.msra.mxu0 0
    %83 = vmatprep.subr.bf16.mxu0 0
    %84 = vmatpush1.bf16.msra.mxu0 0
    %85 = vmatprep.subr.bf16.mxu0 0
    %86 = vmatpush1.bf16.msra.mxu0 0
    %87 = vmatprep.subr.bf16.mxu0 0
    %88 = vmatpush1.bf16.msra.mxu0 0
    %89 = vmatprep.subr.bf16.mxu0 0
    %90 = vmatpush1.bf16.msra.mxu0 0
    %91 = vmatprep.subr.bf16.mxu0 0
    %92 = vmatpush1.bf16.msra.mxu0 0
    %93 = vmatprep.subr.bf16.mxu0 0
    %94 = vmatpush1.bf16.msra.mxu0 0
    %95 = vmatprep.subr.bf16.mxu0 0
    %96 = vmatpush1.bf16.msra.mxu0 0
    %97 = vmatprep.subr.bf16.mxu0 0
    %98 = vmatpush1.bf16.msra.mxu0 0
    %99 = vmatprep.subr.bf16.mxu0 0
    %100 = vmatpush1.bf16.msra.mxu0 0
    %101 = vmatprep.subr.bf16.mxu0 0
    %102 = vmatpush1.bf16.msra.mxu0 0
    %103 = vmatprep.subr.bf16.mxu0 0
    %104 = vmatpush1.bf16.msra.mxu0 0
    %105 = vmatprep.subr.bf16.mxu0 0
    %106 = vmatpush1.bf16.msra.mxu0 0
    %107 = vmatprep.subr.bf16.mxu0 0
    %108 = vmatpush1.bf16.msra.mxu0 0
    %109 = vmatprep.mubr.bf16.mxu0 0
    %110 = vmatmul.mubr.bf16.gmra.mrb[0].mxu0 %v75
    %v111 = vpop.f32.mrb[0].mxu0
    %v112 = vadd.f32 0.0, %v111
    %v113 = vpop.f32.mrb[0].mxu0
    %v114 = vpop.f32.mrb[0].mxu0
    %v115 = vpop.f32.mrb[0].mxu0
    %116 = vdwg.mxu0
    %v117 = vadd.f32 %v60, %v112
    %v118 = vld [vmem:[#allocation6] ss:$0 sm:$0xff]
    %v119 = vadd.f32 %v117, %v118
    %v120 = vld [vmem:[#allocation2 + $0x10] sm:$0xf]
    %v121 = vld [vmem:[#allocation2 + $0x18] sm:$0xf]
    %v122 = vpack.c.bf16 %v119, %v119
    %v123 = vld [vmem:[#allocation6 + $0x1] ss:$0 sm:$0xff]
    %v126 = vunpack.c.l.b16 %v120
    %v127 = vunpack.c.l.b16 %v121
    %v128 = vpack.c.b16 %v127, %v126
    %v131 = vsel %vm73, %v122, 0
    %133 = vmatprep.subr.bf16.mxu0 0
    %134 = vmatpush1.bf16.msra.mxu0 %v128
    %135 = vmatprep.subr.bf16.mxu0 0
    %136 = vmatpush1.bf16.msra.mxu0 0
    %137 = vmatprep.subr.bf16.mxu0 0
    %138 = vmatpush1.bf16.msra.mxu0 0
    %139 = vmatprep.subr.bf16.mxu0 0
    %140 = vmatpush1.bf16.msra.mxu0 0
    %141 = vmatprep.subr.bf16.mxu0 0
    %142 = vmatpush1.bf16.msra.mxu0 0
    %143 = vmatprep.subr.bf16.mxu0 0
    %144 = vmatpush1.bf16.msra.mxu0 0
    %145 = vmatprep.subr.bf16.mxu0 0
    %146 = vmatpush1.bf16.msra.mxu0 0
    %147 = vmatprep.subr.bf16.mxu0 0
    %148 = vmatpush1.bf16.msra.mxu0 0
    %149 = vmatprep.subr.bf16.mxu0 0
    %150 = vmatpush1.bf16.msra.mxu0 0
    %151 = vmatprep.subr.bf16.mxu0 0
    %152 = vmatpush1.bf16.msra.mxu0 0
    %153 = vmatprep.subr.bf16.mxu0 0
    %154 = vmatpush1.bf16.msra.mxu0 0
    %155 = vmatprep.subr.bf16.mxu0 0
    %156 = vmatpush1.bf16.msra.mxu0 0
    %157 = vmatprep.subr.bf16.mxu0 0
    %158 = vmatpush1.bf16.msra.mxu0 0
    %159 = vmatprep.subr.bf16.mxu0 0
    %160 = vmatpush1.bf16.msra.mxu0 0
    %161 = vmatprep.subr.bf16.mxu0 0
    %162 = vmatpush1.bf16.msra.mxu0 0
    %163 = vmatprep.subr.bf16.mxu0 0
    %164 = vmatpush1.bf16.msra.mxu0 0
    %165 = vmatprep.mubr.bf16.mxu0 0
    %166 = vmatmul.mubr.bf16.gmra.mrb[0].mxu0 %v131
    %v167 = vpop.f32.mrb[0].mxu0
    %v168 = vadd.f32 %v123, %v167
    %v169 = vpop.f32.mrb[0].mxu0
    %v170 = vpop.f32.mrb[0].mxu0
    %v171 = vpop.f32.mrb[0].mxu0
    %172 = vdwg.mxu0
    %v173 = vrot.slane %v168, 4
    %v174 = vadd.f32 %v168, %v173
    %v175 = vrot.slane %v174, 2
    %v176 = vadd.f32 %v174, %v175
    %v177 = vrot.slane %v176, 1
    %v178 = vadd.f32 %v176, %v177
    %v179 = vrcp.pop 8.0
    %v180 = vmul.f32 %v178, %v179
    %v181 = vsub.f32 %v168, %v180
    %v182 = vmul.f32 %v181, %v181
    %v183 = vrot.slane %v182, 4
    %v184 = vadd.f32 %v182, %v183
    %v185 = vrot.slane %v184, 2
    %v186 = vadd.f32 %v184, %v185
    %v187 = vrot.slane %v186, 1
    %v188 = vadd.f32 %v186, %v187
    %v189 = vmul.f32 %v188, %v179
    %v190 = vadd.f32 %v189, 1e-05
    %v191 = vrsqrt.pop %v190
    %v192 = vld [vmem:[#allocation6 + $0x2] ss:$0 sm:$0xff]
    %v193 = vmul.f32 %v191, %v192
    %v194 = vmul.f32 %v181, %v193
    %v195 = vld [vmem:[#allocation6 + $0x3] ss:$0 sm:$0xff]
    %v196 = vadd.f32 %v194, %v195
    %v197 = vmax.f32 %v196, 0.0
    %v198 = vld [vmem:[#allocation2 + $0x20] sm:$0xff]
    %v199 = vld [vmem:[#allocation2 + $0x28] sm:$0xff]
    %v200 = vld [vmem:[#allocation2 + $0x30] sm:$0xff]
    %v201 = vld [vmem:[#allocation2 + $0x38] sm:$0xff]
    %v202 = vld [vmem:[#allocation2 + $0x40] sm:$0xff]
    %v203 = vld [vmem:[#allocation2 + $0x48] sm:$0xff]
    %v204 = vld [vmem:[#allocation2 + $0x50] sm:$0xff]
    %v205 = vld [vmem:[#allocation2 + $0x58] sm:$0xff]
    %v206 = vld [vmem:[#allocation2 + $0x60] sm:$0xff]
    %v207 = vld [vmem:[#allocation2 + $0x68] sm:$0xff]
    %v208 = vld [vmem:[#allocation2 + $0x70] sm:$0xff]
    %v209 = vld [vmem:[#allocation2 + $0x78] sm:$0xff]
    %v210 = vld [vmem:[#allocation2 + $0x80] sm:$0xff]
    %v211 = vld [vmem:[#allocation2 + $0x88] sm:$0xff]
    %v212 = vld [vmem:[#allocation2 + $0x90] sm:$0xff]
    %v213 = vld [vmem:[#allocation2 + $0x98] sm:$0xff]
    %v214 = vpack.c.bf16 %v197, %v197
    %s215 = scalar_lea.vmem [#allocation6], 4
    %v216 = vld [vmem:[%s215] ss:$8 sm:$0x3]
    %v218 = vlaneseq
    %v219 = vshrl.u32 %v218, 7
    %v220 = vsub.s32 0, %v219
    %v221 = vrot.slane %v216, %v220
    %v222 = vlaneseq
    %v223 = vshrl.u32 %v222, 7
    %v224 = vsub.s32 1, %v223
    %v225 = vrot.slane %v216, %v224
    %v244 = vunpack.c.l.b16 %v198
    %v245 = vunpack.c.h.b16 %v198
    %v246 = vunpack.c.l.b16 %v199
    %v247 = vunpack.c.h.b16 %v199
    %v248 = vunpack.c.l.b16 %v200
    %v249 = vunpack.c.h.b16 %v200
    %v250 = vunpack.c.l.b16 %v201
    %v251 = vunpack.c.h.b16 %v201
    %v252 = vunpack.c.l.b16 %v202
    %v253 = vunpack.c.h.b16 %v202
    %v254 = vunpack.c.l.b16 %v203
    %v255 = vunpack.c.h.b16 %v203
    %v256 = vunpack.c.l.b16 %v204
    %v257 = vunpack.c.h.b16 %v204
    %v258 = vunpack.c.l.b16 %v205
    %v259 = vunpack.c.h.b16 %v205
    %v260 = vunpack.c.l.b16 %v206
    %v261 = vunpack.c.h.b16 %v206
    %v262 = vunpack.c.l.b16 %v207
    %v263 = vunpack.c.h.b16 %v207
    %v264 = vunpack.c.l.b16 %v208
    %v265 = vunpack.c.h.b16 %v208
    %v266 = vunpack.c.l.b16 %v209
    %v267 = vunpack.c.h.b16 %v209
    %v268 = vunpack.c.l.b16 %v210
    %v269 = vunpack.c.h.b16 %v210
    %v270 = vunpack.c.l.b16 %v211
    %v271 = vunpack.c.h.b16 %v211
    %v272 = vunpack.c.l.b16 %v212
    %v273 = vunpack.c.h.b16 %v212
    %v274 = vunpack.c.l.b16 %v213
    %v275 = vunpack.c.h.b16 %v213
    %v276 = vpack.c.b16 %v246, %v244
    %v277 = vpack.c.b16 %v247, %v245
    %v278 = vpack.c.b16 %v250, %v248
    %v279 = vpack.c.b16 %v251, %v249
    %v280 = vpack.c.b16 %v254, %v252
    %v281 = vpack.c.b16 %v255, %v253
    %v282 = vpack.c.b16 %v258, %v256
    %v283 = vpack.c.b16 %v259, %v257
    %v284 = vpack.c.b16 %v262, %v260
    %v285 = vpack.c.b16 %v263, %v261
    %v286 = vpack.c.b16 %v266, %v264
    %v287 = vpack.c.b16 %v267, %v265
    %v288 = vpack.c.b16 %v270, %v268
    %v289 = vpack.c.b16 %v271, %v269
    %v290 = vpack.c.b16 %v274, %v272
    %v291 = vpack.c.b16 %v275, %v273
    %308 = vmatprep.subr.bf16.mxu0 %v277
    %309 = vmatpush1.bf16.msra.mxu0 %v276
    %310 = vmatprep.subr.bf16.mxu0 %v279
    %311 = vmatpush1.bf16.msra.mxu0 %v278
    %312 = vmatprep.subr.bf16.mxu0 %v281
    %313 = vmatpush1.bf16.msra.mxu0 %v280
    %314 = vmatprep.subr.bf16.mxu0 %v283
    %315 = vmatpush1.bf16.msra.mxu0 %v282
    %316 = vmatprep.subr.bf16.mxu0 %v285
    %317 = vmatpush1.bf16.msra.mxu0 %v284
    %318 = vmatprep.subr.bf16.mxu0 %v287
    %319 = vmatpush1.bf16.msra.mxu0 %v286
    %320 = vmatprep.subr.bf16.mxu0 %v289
    %321 = vmatpush1.bf16.msra.mxu0 %v288
    %322 = vmatprep.subr.bf16.mxu0 %v291
    %323 = vmatpush1.bf16.msra.mxu0 %v290
    %324 = vmatprep.subr.bf16.mxu0 0
    %325 = vmatpush1.bf16.msra.mxu0 0
    %326 = vmatprep.subr.bf16.mxu0 0
    %327 = vmatpush1.bf16.msra.mxu0 0
    %328 = vmatprep.subr.bf16.mxu0 0
    %329 = vmatpush1.bf16.msra.mxu0 0
    %330 = vmatprep.subr.bf16.mxu0 0
    %331 = vmatpush1.bf16.msra.mxu0 0
    %332 = vmatprep.subr.bf16.mxu0 0
    %333 = vmatpush1.bf16.msra.mxu0 0
    %334 = vmatprep.subr.bf16.mxu0 0
    %335 = vmatpush1.bf16.msra.mxu0 0
    %336 = vmatprep.subr.bf16.mxu0 0
    %337 = vmatpush1.bf16.msra.mxu0 0
    %338 = vmatprep.subr.bf16.mxu0 0
    %339 = vmatpush1.bf16.msra.mxu0 0
    %340 = vmatprep.mubr.bf16.mxu0 0
    %341 = vmatmul.mubr.bf16.gmra.mrb[0].mxu0 %v214
    %v342 = vpop.f32.mrb[0].mxu0
    %v343 = vadd.f32 %v221, %v342
    %v344 = vpop.f32.mrb[0].mxu0
    %v345 = vadd.f32 %v225, %v344
    %v346 = vpop.f32.mrb[0].mxu0
    %v347 = vpop.f32.mrb[0].mxu0
    %348 = vdwg.mxu0
    %v349 = vrot.slane %v343, 4
    %v350 = vadd.f32 %v343, %v349
    %v351 = vrot.slane %v350, 2
    %v352 = vadd.f32 %v350, %v351
    %v353 = vrot.slane %v352, 1
    %v354 = vadd.f32 %v352, %v353
    %v355 = vrot.slane %v345, 4
    %v356 = vadd.f32 %v345, %v355
    %v357 = vrot.slane %v356, 2
    %v358 = vadd.f32 %v356, %v357
    %v359 = vrot.slane %v358, 1
    %v360 = vadd.f32 %v358, %v359
    %v361 = vmul.f32 %v354, %v179
    %v362 = vmul.f32 %v360, %v179
    %v363 = vsub.f32 %v343, %v361
    %v364 = vsub.f32 %v345, %v362
    %v365 = vmul.f32 %v363, %v363
    %v366 = vmul.f32 %v364, %v364
    %v367 = vrot.slane %v365, 4
    %v368 = vadd.f32 %v365, %v367
    %v369 = vrot.slane %v368, 2
    %v370 = vadd.f32 %v368, %v369
    %v371 = vrot.slane %v370, 1
    %v372 = vadd.f32 %v370, %v371
    %v373 = vrot.slane %v366, 4
    %v374 = vadd.f32 %v366, %v373
    %v375 = vrot.slane %v374, 2
    %v376 = vadd.f32 %v374, %v375
    %v377 = vrot.slane %v376, 1
    %v378 = vadd.f32 %v376, %v377
    %v379 = vmul.f32 %v372, %v179
    %v380 = vmul.f32 %v378, %v179
    %v381 = vadd.f32 %v379, 1e-05
    %v382 = vadd.f32 %v380, 1e-05
    %v383 = vrsqrt.pop %v381
    %v384 = vrsqrt.pop %v382
    %s385 = scalar_lea.vmem [#allocation6], 5
    %v386 = vld [vmem:[%s385] ss:$8 sm:$0x3]
    %v388 = vlaneseq
    %v389 = vshrl.u32 %v388, 7
    %v390 = vsub.s32 0, %v389
    %v391 = vrot.slane %v386, %v390
    %v392 = vlaneseq
    %v393 = vshrl.u32 %v392, 7
    %v394 = vsub.s32 1, %v393
    %v395 = vrot.slane %v386, %v394
    %v398 = vmul.f32 %v383, %v391
    %v399 = vmul.f32 %v384, %v395
    %v400 = vlaneseq
    %v401 = vshrl.u32 %v400, 7
    %v402 = vsub.s32 0, %v401
    %v403 = vrot.slane %v398, %v402
    %v404 = vlaneseq
    %v405 = vshrl.u32 %v404, 7
    %v406 = vsub.s32 0, %v405
    %v407 = vrot.slane %v399, %v406
    %v408 = vmul.f32 %v363, %v403
    %v409 = vmul.f32 %v364, %v407
    %s410 = scalar_lea.vmem [#allocation6], 6
    %v411 = vld [vmem:[%s410] ss:$8 sm:$0x3]
    %v413 = vlaneseq
    %v414 = vshrl.u32 %v413, 7
    %v415 = vsub.s32 0, %v414
    %v416 = vrot.slane %v411, %v415
    %v417 = vlaneseq
    %v418 = vshrl.u32 %v417, 7
    %v419 = vsub.s32 1, %v418
    %v420 = vrot.slane %v411, %v419
    %v423 = vadd.f32 %v408, %v416
    %v424 = vadd.f32 %v409, %v420
    %v425 = vmax.f32 %v423, 0.0
    %v426 = vmax.f32 %v424, 0.0
    %v427 = vld [vmem:[#allocation2 + $0xa0] sm:$0xf]
    %v428 = vld [vmem:[#allocation2 + $0xa8] sm:$0xf]
    %v429 = vld [vmem:[#allocation2 + $0xb0] sm:$0xf]
    %v430 = vld [vmem:[#allocation2 + $0xb8] sm:$0xf]
    %v431 = vld [vmem:[#allocation2 + $0xc0] sm:$0xf]
    %v432 = vld [vmem:[#allocation2 + $0xc8] sm:$0xf]
    %v433 = vld [vmem:[#allocation2 + $0xd0] sm:$0xf]
    %v434 = vld [vmem:[#allocation2 + $0xd8] sm:$0xf]
    %v435 = vld [vmem:[#allocation2 + $0xe0] sm:$0xf]
    %v436 = vld [vmem:[#allocation2 + $0xe8] sm:$0xf]
    %v437 = vld [vmem:[#allocation2 + $0xf0] sm:$0xf]
    %v438 = vld [vmem:[#allocation2 + $0xf8] sm:$0xf]
    %v439 = vld [vmem:[#allocation2 + $0x100] sm:$0xf]
    %v440 = vld [vmem:[#allocation2 + $0x108] sm:$0xf]
    %v441 = vld [vmem:[#allocation2 + $0x110] sm:$0xf]
    %v442 = vld [vmem:[#allocation2 + $0x118] sm:$0xf]
    %v443 = vld [vmem:[#allocation2 + $0x120] sm:$0xf]
    %v444 = vld [vmem:[#allocation2 + $0x128] sm:$0xf]
    %v445 = vld [vmem:[#allocation2 + $0x130] sm:$0xf]
    %v446 = vld [vmem:[#allocation2 + $0x138] sm:$0xf]
    %v447 = vld [vmem:[#allocation2 + $0x140] sm:$0xf]
    %v448 = vld [vmem:[#allocation2 + $0x148] sm:$0xf]
    %v449 = vld [vmem:[#allocation2 + $0x150] sm:$0xf]
    %v450 = vld [vmem:[#allocation2 + $0x158] sm:$0xf]
    %v451 = vld [vmem:[#allocation2 + $0x160] sm:$0xf]
    %v452 = vld [vmem:[#allocation2 + $0x168] sm:$0xf]
    %v453 = vld [vmem:[#allocation2 + $0x170] sm:$0xf]
    %v454 = vld [vmem:[#allocation2 + $0x178] sm:$0xf]
    %v455 = vld [vmem:[#allocation2 + $0x180] sm:$0xf]
    %v456 = vld [vmem:[#allocation2 + $0x188] sm:$0xf]
    %v457 = vld [vmem:[#allocation2 + $0x190] sm:$0xf]
    %v458 = vld [vmem:[#allocation2 + $0x198] sm:$0xf]
    %v459 = vpack.c.bf16 %v425, %v425
    %v460 = vpack.c.bf16 %v426, %v426
    %v461 = vld [vmem:[#allocation6 + $0x7] ss:$0 sm:$0xff]
    %v494 = vunpack.c.l.b16 %v427
    %v495 = vunpack.c.l.b16 %v428
    %v496 = vunpack.c.l.b16 %v429
    %v497 = vunpack.c.l.b16 %v430
    %v498 = vunpack.c.l.b16 %v431
    %v499 = vunpack.c.l.b16 %v432
    %v500 = vunpack.c.l.b16 %v433
    %v501 = vunpack.c.l.b16 %v434
    %v502 = vunpack.c.l.b16 %v435
    %v503 = vunpack.c.l.b16 %v436
    %v504 = vunpack.c.l.b16 %v437
    %v505 = vunpack.c.l.b16 %v438
    %v506 = vunpack.c.l.b16 %v439
    %v507 = vunpack.c.l.b16 %v440
    %v508 = vunpack.c.l.b16 %v441
    %v509 = vunpack.c.l.b16 %v442
    %v510 = vunpack.c.l.b16 %v443
    %v511 = vunpack.c.l.b16 %v444
    %v512 = vunpack.c.l.b16 %v445
    %v513 = vunpack.c.l.b16 %v446
    %v514 = vunpack.c.l.b16 %v447
    %v515 = vunpack.c.l.b16 %v448
    %v516 = vunpack.c.l.b16 %v449
    %v517 = vunpack.c.l.b16 %v450
    %v518 = vunpack.c.l.b16 %v451
    %v519 = vunpack.c.l.b16 %v452
    %v520 = vunpack.c.l.b16 %v453
    %v521 = vunpack.c.l.b16 %v454
    %v522 = vunpack.c.l.b16 %v455
    %v523 = vunpack.c.l.b16 %v456
    %v524 = vunpack.c.l.b16 %v457
    %v525 = vunpack.c.l.b16 %v458
    %v526 = vpack.c.b16 %v495, %v494
    %v527 = vpack.c.b16 %v497, %v496
    %v528 = vpack.c.b16 %v499, %v498
    %v529 = vpack.c.b16 %v501, %v500
    %v530 = vpack.c.b16 %v503, %v502
    %v531 = vpack.c.b16 %v505, %v504
    %v532 = vpack.c.b16 %v507, %v506
    %v533 = vpack.c.b16 %v509, %v508
    %v534 = vpack.c.b16 %v511, %v510
    %v535 = vpack.c.b16 %v513, %v512
    %v536 = vpack.c.b16 %v515, %v514
    %v537 = vpack.c.b16 %v517, %v516
    %v538 = vpack.c.b16 %v519, %v518
    %v539 = vpack.c.b16 %v521, %v520
    %v540 = vpack.c.b16 %v523, %v522
    %v541 = vpack.c.b16 %v525, %v524
    %558 = vmatprep.subr.bf16.mxu0 0
    %559 = vmatpush1.bf16.msra.mxu0 %v526
    %560 = vmatprep.subr.bf16.mxu0 0
    %561 = vmatpush1.bf16.msra.mxu0 %v527
    %562 = vmatprep.subr.bf16.mxu0 0
    %563 = vmatpush1.bf16.msra.mxu0 %v528
    %564 = vmatprep.subr.bf16.mxu0 0
    %565 = vmatpush1.bf16.msra.mxu0 %v529
    %566 = vmatprep.subr.bf16.mxu0 0
    %567 = vmatpush1.bf16.msra.mxu0 %v530
    %568 = vmatprep.subr.bf16.mxu0 0
    %569 = vmatpush1.bf16.msra.mxu0 %v531
    %570 = vmatprep.subr.bf16.mxu0 0
    %571 = vmatpush1.bf16.msra.mxu0 %v532
    %572 = vmatprep.subr.bf16.mxu0 0
    %573 = vmatpush1.bf16.msra.mxu0 %v533
    %574 = vmatprep.subr.bf16.mxu0 0
    %575 = vmatpush1.bf16.msra.mxu0 %v534
    %576 = vmatprep.subr.bf16.mxu0 0
    %577 = vmatpush1.bf16.msra.mxu0 %v535
    %578 = vmatprep.subr.bf16.mxu0 0
    %579 = vmatpush1.bf16.msra.mxu0 %v536
    %580 = vmatprep.subr.bf16.mxu0 0
    %581 = vmatpush1.bf16.msra.mxu0 %v537
    %582 = vmatprep.subr.bf16.mxu0 0
    %583 = vmatpush1.bf16.msra.mxu0 %v538
    %584 = vmatprep.subr.bf16.mxu0 0
    %585 = vmatpush1.bf16.msra.mxu0 %v539
    %586 = vmatprep.subr.bf16.mxu0 0
    %587 = vmatpush1.bf16.msra.mxu0 %v540
    %588 = vmatprep.subr.bf16.mxu0 0
    %589 = vmatpush1.bf16.msra.mxu0 %v541
    %590 = vmatprep.mubr.bf16.mxu0 %v460
    %591 = vmatmul.mubr.bf16.gmra.mrb[0].mxu0 %v459
    %v592 = vpop.f32.mrb[0].mxu0
    %v593 = vadd.f32 %v461, %v592
    %v594 = vpop.f32.mrb[0].mxu0
    %v595 = vpop.f32.mrb[0].mxu0
    %v596 = vpop.f32.mrb[0].mxu0
    %597 = vdwg.mxu0
    %v598 = vrot.slane %v593, 4
    %v599 = vadd.f32 %v593, %v598
    %v600 = vrot.slane %v599, 2
    %v601 = vadd.f32 %v599, %v600
    %v602 = vrot.slane %v601, 1
    %v603 = vadd.f32 %v601, %v602
    %v604 = vmul.f32 %v603, %v179
    %v605 = vsub.f32 %v593, %v604
    %v606 = vmul.f32 %v605, %v605
    %v607 = vrot.slane %v606, 4
    %v608 = vadd.f32 %v606, %v607
    %v609 = vrot.slane %v608, 2
    %v610 = vadd.f32 %v608, %v609
    %v611 = vrot.slane %v610, 1
    %v612 = vadd.f32 %v610, %v611
    %v613 = vmul.f32 %v612, %v179
    %v614 = vadd.f32 %v613, 1e-05
    %v615 = vrsqrt.pop %v614
    %v616 = vld [vmem:[#allocation6 + $0x10] ss:$0 sm:$0xff]
    %v617 = vmul.f32 %v615, %v616
    %v618 = vmul.f32 %v605, %v617
    %v619 = vld [vmem:[#allocation6 + $0x11] ss:$0 sm:$0xff]
    %v620 = vadd.f32 %v618, %v619
    %v621 = vmax.f32 %v620, 0.0
    %v622 = vld [vmem:[#allocation2 + $0x1a0] sm:$0xf]
    %v623 = vld [vmem:[#allocation2 + $0x1a8] sm:$0xf]
    %v624 = vld [vmem:[#allocation2 + $0x1b0] sm:$0xf]
    %v625 = vld [vmem:[#allocation2 + $0x1b8] sm:$0xf]
    %v626 = vld [vmem:[#allocation2 + $0x1c0] sm:$0xf]
    %v627 = vld [vmem:[#allocation2 + $0x1c8] sm:$0xf]
    %v628 = vld [vmem:[#allocation2 + $0x1d0] sm:$0xf]
    %v629 = vld [vmem:[#allocation2 + $0x1d8] sm:$0xf]
    %v630 = vld [vmem:[#allocation2 + $0x1e0] sm:$0xf]
    %v631 = vld [vmem:[#allocation2 + $0x1e8] sm:$0xf]
    %v632 = vld [vmem:[#allocation2 + $0x1f0] sm:$0xf]
    %v633 = vld [vmem:[#allocation2 + $0x1f8] sm:$0xf]
    %v634 = vld [vmem:[#allocation2 + $0x200] sm:$0xf]
    %v635 = vld [vmem:[#allocation2 + $0x208] sm:$0xf]
    %v636 = vld [vmem:[#allocation2 + $0x210] sm:$0xf]
    %v637 = vld [vmem:[#allocation2 + $0x218] sm:$0xf]
    %v638 = vpack.c.bf16 %v621, %v621
    %v639 = vld [vmem:[#allocation6 + $0x12] ss:$0 sm:$0xff]
    %v656 = vunpack.c.l.b16 %v622
    %v657 = vunpack.c.l.b16 %v623
    %v658 = vunpack.c.l.b16 %v624
    %v659 = vunpack.c.l.b16 %v625
    %v660 = vunpack.c.l.b16 %v626
    %v661 = vunpack.c.l.b16 %v627
    %v662 = vunpack.c.l.b16 %v628
    %v663 = vunpack.c.l.b16 %v629
    %v664 = vunpack.c.l.b16 %v630
    %v665 = vunpack.c.l.b16 %v631
    %v666 = vunpack.c.l.b16 %v632
    %v667 = vunpack.c.l.b16 %v633
    %v668 = vunpack.c.l.b16 %v634
    %v669 = vunpack.c.l.b16 %v635
    %v670 = vunpack.c.l.b16 %v636
    %v671 = vunpack.c.l.b16 %v637
    %v672 = vpack.c.b16 %v657, %v656
    %v673 = vpack.c.b16 %v659, %v658
    %v674 = vpack.c.b16 %v661, %v660
    %v675 = vpack.c.b16 %v663, %v662
    %v676 = vpack.c.b16 %v665, %v664
    %v677 = vpack.c.b16 %v667, %v666
    %v678 = vpack.c.b16 %v669, %v668
    %v679 = vpack.c.b16 %v671, %v670
    %688 = vmatprep.subr.bf16.mxu0 0
    %689 = vmatpush1.bf16.msra.mxu0 %v672
    %690 = vmatprep.subr.bf16.mxu0 0
    %691 = vmatpush1.bf16.msra.mxu0 %v673
    %692 = vmatprep.subr.bf16.mxu0 0
    %693 = vmatpush1.bf16.msra.mxu0 %v674
    %694 = vmatprep.subr.bf16.mxu0 0
    %695 = vmatpush1.bf16.msra.mxu0 %v675
    %696 = vmatprep.subr.bf16.mxu0 0
    %697 = vmatpush1.bf16.msra.mxu0 %v676
    %698 = vmatprep.subr.bf16.mxu0 0
    %699 = vmatpush1.bf16.msra.mxu0 %v677
    %700 = vmatprep.subr.bf16.mxu0 0
    %701 = vmatpush1.bf16.msra.mxu0 %v678
    %702 = vmatprep.subr.bf16.mxu0 0
    %703 = vmatpush1.bf16.msra.mxu0 %v679
    %704 = vmatprep.subr.bf16.mxu0 0
    %705 = vmatpush1.bf16.msra.mxu0 0
    %706 = vmatprep.subr.bf16.mxu0 0
    %707 = vmatpush1.bf16.msra.mxu0 0
    %708 = vmatprep.subr.bf16.mxu0 0
    %709 = vmatpush1.bf16.msra.mxu0 0
    %710 = vmatprep.subr.bf16.mxu0 0
    %711 = vmatpush1.bf16.msra.mxu0 0
    %712 = vmatprep.subr.bf16.mxu0 0
    %713 = vmatpush1.bf16.msra.mxu0 0
    %714 = vmatprep.subr.bf16.mxu0 0
    %715 = vmatpush1.bf16.msra.mxu0 0
    %716 = vmatprep.subr.bf16.mxu0 0
    %717 = vmatpush1.bf16.msra.mxu0 0
    %718 = vmatprep.subr.bf16.mxu0 0
    %719 = vmatpush1.bf16.msra.mxu0 0
    %720 = vmatprep.mubr.bf16.mxu0 0
    %721 = vmatmul.mubr.bf16.gmra.mrb[0].mxu0 %v638
    %v722 = vpop.f32.mrb[0].mxu0
    %v723 = vadd.f32 %v639, %v722
    %v724 = vpop.f32.mrb[0].mxu0
    %v725 = vpop.f32.mrb[0].mxu0
    %v726 = vpop.f32.mrb[0].mxu0
    %727 = vdwg.mxu0
    %v728 = vld [vmem:[#allocation4] sm:$0xff]
    %v729 = vld [vmem:[#allocation4 + $0x8] sm:$0xff]
    %v730 = vld [vmem:[#allocation6 + $0x13] ss:$0 sm:$0xff]
    %v732 = vsel %vm73, %v723, 0
    %734 = vmatprep.subr.mxu0 0.0
    %735 = vmatpush1.msra.mxu0 %v728
    %736 = vmatprep.subr.mxu0 0.0
    %737 = vmatpush1.msra.mxu0 %v729
    %738 = vmatprep.subr.mxu0 0.0
    %739 = vmatpush1.msra.mxu0 0.0
    %740 = vmatprep.subr.mxu0 0.0
    %741 = vmatpush1.msra.mxu0 0.0
    %742 = vmatprep.subr.mxu0 0.0
    %743 = vmatpush1.msra.mxu0 0.0
    %744 = vmatprep.subr.mxu0 0.0
    %745 = vmatpush1.msra.mxu0 0.0
    %746 = vmatprep.subr.mxu0 0.0
    %747 = vmatpush1.msra.mxu0 0.0
    %748 = vmatprep.subr.mxu0 0.0
    %749 = vmatpush1.msra.mxu0 0.0
    %750 = vmatprep.subr.mxu0 0.0
    %751 = vmatpush1.msra.mxu0 0.0
    %752 = vmatprep.subr.mxu0 0.0
    %753 = vmatpush1.msra.mxu0 0.0
    %754 = vmatprep.subr.mxu0 0.0
    %755 = vmatpush1.msra.mxu0 0.0
    %756 = vmatprep.subr.mxu0 0.0
    %757 = vmatpush1.msra.mxu0 0.0
    %758 = vmatprep.subr.mxu0 0.0
    %759 = vmatpush1.msra.mxu0 0.0
    %760 = vmatprep.subr.mxu0 0.0
    %761 = vmatpush1.msra.mxu0 0.0
    %762 = vmatprep.subr.mxu0 0.0
    %763 = vmatpush1.msra.mxu0 0.0
    %764 = vmatprep.subr.mxu0 0.0
    %765 = vmatpush1.msra.mxu0 0.0
    %766 = vmatprep.subr.mxu0 0.0
    %767 = vmatpush1.msra.mxu0 0.0
    %768 = vmatprep.subr.mxu0 0.0
    %769 = vmatpush1.msra.mxu0 0.0
    %770 = vmatprep.subr.mxu0 0.0
    %771 = vmatpush1.msra.mxu0 0.0
    %772 = vmatprep.subr.mxu0 0.0
    %773 = vmatpush1.msra.mxu0 0.0
    %774 = vmatprep.subr.mxu0 0.0
    %775 = vmatpush1.msra.mxu0 0.0
    %776 = vmatprep.subr.mxu0 0.0
    %777 = vmatpush1.msra.mxu0 0.0
    %778 = vmatprep.subr.mxu0 0.0
    %779 = vmatpush1.msra.mxu0 0.0
    %780 = vmatprep.subr.mxu0 0.0
    %781 = vmatpush1.msra.mxu0 0.0
    %782 = vmatprep.subr.mxu0 0.0
    %783 = vmatpush1.msra.mxu0 0.0
    %784 = vmatprep.subr.mxu0 0.0
    %785 = vmatpush1.msra.mxu0 0.0
    %786 = vmatprep.subr.mxu0 0.0
    %787 = vmatpush1.msra.mxu0 0.0
    %788 = vmatprep.subr.mxu0 0.0
    %789 = vmatpush1.msra.mxu0 0.0
    %790 = vmatprep.subr.mxu0 0.0
    %791 = vmatpush1.msra.mxu0 0.0
    %792 = vmatprep.subr.mxu0 0.0
    %793 = vmatpush1.msra.mxu0 0.0
    %794 = vmatprep.subr.mxu0 0.0
    %795 = vmatpush1.msra.mxu0 0.0
    %796 = vmatprep.subr.mxu0 0.0
    %797 = vmatpush1.msra.mxu0 0.0
    %798 = vmatprep.mubr.f32.mxu0 0.0
    %799 = vmatmul.mubr.f32.gmra.mrb[0].mxu0 %v732
    %v800 = vpop.f32.mrb[0].mxu0
    %v801 = vadd.f32 %v730, %v800
    %v802 = vpop.f32.mrb[0].mxu0
    %803 = vdwg.mxu0
    %805 = vrot.lane.b32.xlu0 %v801, 56
    %v806 = vpop.permute.xlu0 %805
    %vm808 = vcmask 638400
    %809 = vst.msk [vmem:[%s4] sm:$0xff] %vm808, %v806
    %v810 = vld [vmem:[#allocation4 + $0x10] sm:$0xff]
    %v811 = vld [vmem:[#allocation4 + $0x18] sm:$0xff]
    %v812 = vld [vmem:[#allocation4 + $0x20] sm:$0x3f]
    %v813 = vld [vmem:[#allocation6 + $0x14] ss:$0 sm:$0xff]
    %vm814 = vcmask 179200
    %v815 = vsel %vm814, %v801, 0
    %vm817 = vcmask 1045504
    %v819 = vsel %vm817, %v812, 0
    %821 = vmatprep.subr.mxu0 0.0
    %822 = vmatpush1.msra.mxu0 %v810
    %823 = vmatprep.subr.mxu0 0.0
    %824 = vmatpush1.msra.mxu0 %v811
    %825 = vmatprep.subr.mxu0 0.0
    %826 = vmatpush1.msra.mxu0 %v819
    %827 = vmatprep.subr.mxu0 0.0
    %828 = vmatpush1.msra.mxu0 0.0
    %829 = vmatprep.subr.mxu0 0.0
    %830 = vmatpush1.msra.mxu0 0.0
    %831 = vmatprep.subr.mxu0 0.0
    %832 = vmatpush1.msra.mxu0 0.0
    %833 = vmatprep.subr.mxu0 0.0
    %834 = vmatpush1.msra.mxu0 0.0
    %835 = vmatprep.subr.mxu0 0.0
    %836 = vmatpush1.msra.mxu0 0.0
    %837 = vmatprep.subr.mxu0 0.0
    %838 = vmatpush1.msra.mxu0 0.0
    %839 = vmatprep.subr.mxu0 0.0
    %840 = vmatpush1.msra.mxu0 0.0
    %841 = vmatprep.subr.mxu0 0.0
    %842 = vmatpush1.msra.mxu0 0.0
    %843 = vmatprep.subr.mxu0 0.0
    %844 = vmatpush1.msra.mxu0 0.0
    %845 = vmatprep.subr.mxu0 0.0
    %846 = vmatpush1.msra.mxu0 0.0
    %847 = vmatprep.subr.mxu0 0.0
    %848 = vmatpush1.msra.mxu0 0.0
    %849 = vmatprep.subr.mxu0 0.0
    %850 = vmatpush1.msra.mxu0 0.0
    %851 = vmatprep.subr.mxu0 0.0
    %852 = vmatpush1.msra.mxu0 0.0
    %853 = vmatprep.subr.mxu0 0.0
    %854 = vmatpush1.msra.mxu0 0.0
    %855 = vmatprep.subr.mxu0 0.0
    %856 = vmatpush1.msra.mxu0 0.0
    %857 = vmatprep.subr.mxu0 0.0
    %858 = vmatpush1.msra.mxu0 0.0
    %859 = vmatprep.subr.mxu0 0.0
    %860 = vmatpush1.msra.mxu0 0.0
    %861 = vmatprep.subr.mxu0 0.0
    %862 = vmatpush1.msra.mxu0 0.0
    %863 = vmatprep.subr.mxu0 0.0
    %864 = vmatpush1.msra.mxu0 0.0
    %865 = vmatprep.subr.mxu0 0.0
    %866 = vmatpush1.msra.mxu0 0.0
    %867 = vmatprep.subr.mxu0 0.0
    %868 = vmatpush1.msra.mxu0 0.0
    %869 = vmatprep.subr.mxu0 0.0
    %870 = vmatpush1.msra.mxu0 0.0
    %871 = vmatprep.subr.mxu0 0.0
    %872 = vmatpush1.msra.mxu0 0.0
    %873 = vmatprep.subr.mxu0 0.0
    %874 = vmatpush1.msra.mxu0 0.0
    %875 = vmatprep.subr.mxu0 0.0
    %876 = vmatpush1.msra.mxu0 0.0
    %877 = vmatprep.subr.mxu0 0.0
    %878 = vmatpush1.msra.mxu0 0.0
    %879 = vmatprep.subr.mxu0 0.0
    %880 = vmatpush1.msra.mxu0 0.0
    %881 = vmatprep.subr.mxu0 0.0
    %882 = vmatpush1.msra.mxu0 0.0
    %883 = vmatprep.subr.mxu0 0.0
    %884 = vmatpush1.msra.mxu0 0.0
    %885 = vmatprep.mubr.f32.mxu0 0.0
    %886 = vmatmul.mubr.f32.gmra.mrb[0].mxu0 %v815
    %v887 = vpop.f32.mrb[0].mxu0
    %v888 = vadd.f32 %v813, %v887
    %v889 = vpop.f32.mrb[0].mxu0
    %890 = vdwg.mxu0
    %v891 = vtanh.pop %v888
    %vm892 = vcmask 195584
    %v893 = vsel %vm892, %v891, 0.0
    %v894 = vrot.slane %v893, 4
    %v895 = vadd.f32 %v893, %v894
    %v896 = vrot.slane %v895, 2
    %v897 = vadd.f32 %v895, %v896
    %v898 = vrot.slane %v897, 1
    %v899 = vadd.f32 %v897, %v898
    %v900 = vmul.f32 %v899, %v179
    %v901 = vsub.f32 %v891, %v900
    %v902 = vmul.f32 %v901, %v901
    %v903 = vsel %vm892, %v902, 0.0
    %v904 = vrot.slane %v903, 4
    %v905 = vadd.f32 %v903, %v904
    %v906 = vrot.slane %v905, 2
    %v907 = vadd.f32 %v905, %v906
    %v908 = vrot.slane %v907, 1
    %v909 = vadd.f32 %v907, %v908
    %v910 = vmul.f32 %v909, %v179
    %v911 = vadd.f32 %v910, 1e-05
    %v912 = vrsqrt.pop %v911
    %v913 = vld [vmem:[#allocation6 + $0x15] ss:$0 sm:$0xff]
    %v914 = vmul.f32 %v912, %v913
    %v915 = vmul.f32 %v901, %v914
    %v916 = vld [vmem:[#allocation6 + $0x16] ss:$0 sm:$0xff]
    %v917 = vadd.f32 %v915, %v916
    %918 = vst.msk [vmem:[%s4] sm:$0xff] %vm892, %v917
    %v919 = vld [vmem:[#allocation4 + $0x28] sm:$0xff]
    %v920 = vld [vmem:[#allocation4 + $0x30] sm:$0xff]
    %v921 = vld [vmem:[#allocation4 + $0x38] sm:$0xff]
    %v922 = vld [vmem:[#allocation4 + $0x40] sm:$0xff]
    %v923 = vld [vmem:[#allocation4 + $0x48] sm:$0xff]
    %v924 = vld [vmem:[#allocation4 + $0x50] sm:$0xff]
    %v925 = vld [vmem:[#allocation4 + $0x58] sm:$0xff]
    %v926 = vld [vmem:[#allocation4 + $0x60] sm:$0xff]
    %v927 = vld [vmem:[#allocation4 + $0x68] sm:$0xff]
    %v928 = vld [vmem:[#allocation4 + $0x70] sm:$0x3f]
    %v929 = vld [vmem:[%s4] sm:$0xff]
    %v930 = vld [vmem:[#allocation6 + $0x17] ss:$0 sm:$0xff]
    %vm931 = vcmask 637952
    %v933 = vsel %vm931, %v929, 0
    %v936 = vsel %vm817, %v928, 0
    %938 = vmatprep.subr.mxu0 0.0
    %939 = vmatpush1.msra.mxu0 %v919
    %940 = vmatprep.subr.mxu0 0.0
    %941 = vmatpush1.msra.mxu0 %v920
    %942 = vmatprep.subr.mxu0 0.0
    %943 = vmatpush1.msra.mxu0 %v921
    %944 = vmatprep.subr.mxu0 0.0
    %945 = vmatpush1.msra.mxu0 %v922
    %946 = vmatprep.subr.mxu0 0.0
    %947 = vmatpush1.msra.mxu0 %v923
    %948 = vmatprep.subr.mxu0 0.0
    %949 = vmatpush1.msra.mxu0 %v924
    %950 = vmatprep.subr.mxu0 0.0
    %951 = vmatpush1.msra.mxu0 %v925
    %952 = vmatprep.subr.mxu0 0.0
    %953 = vmatpush1.msra.mxu0 %v926
    %954 = vmatprep.subr.mxu0 0.0
    %955 = vmatpush1.msra.mxu0 %v927
    %956 = vmatprep.subr.mxu0 0.0
    %957 = vmatpush1.msra.mxu0 %v936
    %958 = vmatprep.subr.mxu0 0.0
    %959 = vmatpush1.msra.mxu0 0.0
    %960 = vmatprep.subr.mxu0 0.0
    %961 = vmatpush1.msra.mxu0 0.0
    %962 = vmatprep.subr.mxu0 0.0
    %963 = vmatpush1.msra.mxu0 0.0
    %964 = vmatprep.subr.mxu0 0.0
    %965 = vmatpush1.msra.mxu0 0.0
    %966 = vmatprep.subr.mxu0 0.0
    %967 = vmatpush1.msra.mxu0 0.0
    %968 = vmatprep.subr.mxu0 0.0
    %969 = vmatpush1.msra.mxu0 0.0
    %970 = vmatprep.subr.mxu0 0.0
    %971 = vmatpush1.msra.mxu0 0.0
    %972 = vmatprep.subr.mxu0 0.0
    %973 = vmatpush1.msra.mxu0 0.0
    %974 = vmatprep.subr.mxu0 0.0
    %975 = vmatpush1.msra.mxu0 0.0
    %976 = vmatprep.subr.mxu0 0.0
    %977 = vmatpush1.msra.mxu0 0.0
    %978 = vmatprep.subr.mxu0 0.0
    %979 = vmatpush1.msra.mxu0 0.0
    %980 = vmatprep.subr.mxu0 0.0
    %981 = vmatpush1.msra.mxu0 0.0
    %982 = vmatprep.subr.mxu0 0.0
    %983 = vmatpush1.msra.mxu0 0.0
    %984 = vmatprep.subr.mxu0 0.0
    %985 = vmatpush1.msra.mxu0 0.0
    %986 = vmatprep.subr.mxu0 0.0
    %987 = vmatpush1.msra.mxu0 0.0
    %988 = vmatprep.subr.mxu0 0.0
    %989 = vmatpush1.msra.mxu0 0.0
    %990 = vmatprep.subr.mxu0 0.0
    %991 = vmatpush1.msra.mxu0 0.0
    %992 = vmatprep.subr.mxu0 0.0
    %993 = vmatpush1.msra.mxu0 0.0
    %994 = vmatprep.subr.mxu0 0.0
    %995 = vmatpush1.msra.mxu0 0.0
    %996 = vmatprep.subr.mxu0 0.0
    %997 = vmatpush1.msra.mxu0 0.0
    %998 = vmatprep.subr.mxu0 0.0
    %999 = vmatpush1.msra.mxu0 0.0
    %1000 = vmatprep.subr.mxu0 0.0
    %1001 = vmatpush1.msra.mxu0 0.0
    %1002 = vmatprep.mubr.f32.mxu0 0.0
    %1003 = vmatmul.mubr.f32.gmra.mrb[0].mxu0 %v933
    %v1004 = vpop.f32.mrb[0].mxu0
    %v1005 = vadd.f32 %v930, %v1004
    %v1006 = vpop.f32.mrb[0].mxu0
    %1007 = vdwg.mxu0
    %v1008 = vtanh.pop %v1005
    %vm1009 = vcmask 97280
    %v1010 = vsel %vm1009, %v1008, 0.0
    %v1011 = vrot.slane %v1010, 4
    %v1012 = vadd.f32 %v1010, %v1011
    %v1013 = vrot.slane %v1012, 2
    %v1014 = vadd.f32 %v1012, %v1013
    %v1015 = vrot.slane %v1014, 1
    %v1016 = vadd.f32 %v1014, %v1015
    %v1017 = vmul.f32 %v1016, %v179
    %v1018 = vsub.f32 %v1008, %v1017
    %v1019 = vmul.f32 %v1018, %v1018
    %v1020 = vsel %vm1009, %v1019, 0.0
    %v1021 = vrot.slane %v1020, 4
    %v1022 = vadd.f32 %v1020, %v1021
    %v1023 = vrot.slane %v1022, 2
    %v1024 = vadd.f32 %v1022, %v1023
    %v1025 = vrot.slane %v1024, 1
    %v1026 = vadd.f32 %v1024, %v1025
    %v1027 = vmul.f32 %v1026, %v179
    %v1028 = vadd.f32 %v1027, 1e-05
    %v1029 = vrsqrt.pop %v1028
    %v1030 = vld [vmem:[#allocation6 + $0x20] ss:$0 sm:$0xff]
    %v1031 = vmul.f32 %v1029, %v1030
    %v1032 = vmul.f32 %v1018, %v1031
    %v1033 = vld [vmem:[#allocation6 + $0x21] ss:$0 sm:$0xff]
    %v1034 = vadd.f32 %v1032, %v1033
    %1036 = vrot.lane.b32.xlu0 %v1034, 24
    %v1037 = vpop.permute.xlu0 %1036
    %vm1039 = vcmask 294080
    %1040 = vst.msk [vmem:[%s4] sm:$0xff] %vm1039, %v1037
    %v1041 = vld [vmem:[#allocation4 + $0x78] sm:$0xff]
    %v1042 = vld [vmem:[#allocation4 + $0x80] sm:$0xf]
    %v1043 = vld [vmem:[#allocation6 + $0x22] ss:$0 sm:$0xff]
    %v1044 = vsel %vm1009, %v1034, 0
    %vm1046 = vcmask 1043456
    %v1048 = vsel %vm1046, %v1042, 0
    %1050 = vmatprep.subr.mxu0 0.0
    %1051 = vmatpush1.msra.mxu0 %v1041
    %1052 = vmatprep.subr.mxu0 0.0
    %1053 = vmatpush1.msra.mxu0 %v1048
    %1054 = vmatprep.subr.mxu0 0.0
    %1055 = vmatpush1.msra.mxu0 0.0
    %1056 = vmatprep.subr.mxu0 0.0
    %1057 = vmatpush1.msra.mxu0 0.0
    %1058 = vmatprep.subr.mxu0 0.0
    %1059 = vmatpush1.msra.mxu0 0.0
    %1060 = vmatprep.subr.mxu0 0.0
    %1061 = vmatpush1.msra.mxu0 0.0
    %1062 = vmatprep.subr.mxu0 0.0
    %1063 = vmatpush1.msra.mxu0 0.0
    %1064 = vmatprep.subr.mxu0 0.0
    %1065 = vmatpush1.msra.mxu0 0.0
    %1066 = vmatprep.subr.mxu0 0.0
    %1067 = vmatpush1.msra.mxu0 0.0
    %1068 = vmatprep.subr.mxu0 0.0
    %1069 = vmatpush1.msra.mxu0 0.0
    %1070 = vmatprep.subr.mxu0 0.0
    %1071 = vmatpush1.msra.mxu0 0.0
    %1072 = vmatprep.subr.mxu0 0.0
    %1073 = vmatpush1.msra.mxu0 0.0
    %1074 = vmatprep.subr.mxu0 0.0
    %1075 = vmatpush1.msra.mxu0 0.0
    %1076 = vmatprep.subr.mxu0 0.0
    %1077 = vmatpush1.msra.mxu0 0.0
    %1078 = vmatprep.subr.mxu0 0.0
    %1079 = vmatpush1.msra.mxu0 0.0
    %1080 = vmatprep.subr.mxu0 0.0
    %1081 = vmatpush1.msra.mxu0 0.0
    %1082 = vmatprep.subr.mxu0 0.0
    %1083 = vmatpush1.msra.mxu0 0.0
    %1084 = vmatprep.subr.mxu0 0.0
    %1085 = vmatpush1.msra.mxu0 0.0
    %1086 = vmatprep.subr.mxu0 0.0
    %1087 = vmatpush1.msra.mxu0 0.0
    %1088 = vmatprep.subr.mxu0 0.0
    %1089 = vmatpush1.msra.mxu0 0.0
    %1090 = vmatprep.subr.mxu0 0.0
    %1091 = vmatpush1.msra.mxu0 0.0
    %1092 = vmatprep.subr.mxu0 0.0
    %1093 = vmatpush1.msra.mxu0 0.0
    %1094 = vmatprep.subr.mxu0 0.0
    %1095 = vmatpush1.msra.mxu0 0.0
    %1096 = vmatprep.subr.mxu0 0.0
    %1097 = vmatpush1.msra.mxu0 0.0
    %1098 = vmatprep.subr.mxu0 0.0
    %1099 = vmatpush1.msra.mxu0 0.0
    %1100 = vmatprep.subr.mxu0 0.0
    %1101 = vmatpush1.msra.mxu0 0.0
    %1102 = vmatprep.subr.mxu0 0.0
    %1103 = vmatpush1.msra.mxu0 0.0
    %1104 = vmatprep.subr.mxu0 0.0
    %1105 = vmatpush1.msra.mxu0 0.0
    %1106 = vmatprep.subr.mxu0 0.0
    %1107 = vmatpush1.msra.mxu0 0.0
    %1108 = vmatprep.subr.mxu0 0.0
    %1109 = vmatpush1.msra.mxu0 0.0
    %1110 = vmatprep.subr.mxu0 0.0
    %1111 = vmatpush1.msra.mxu0 0.0
    %1112 = vmatprep.subr.mxu0 0.0
    %1113 = vmatpush1.msra.mxu0 0.0
    %1114 = vmatprep.mubr.f32.mxu0 0.0
    %1115 = vmatmul.mubr.f32.gmra.mrb[0].mxu0 %v1044
    %v1116 = vpop.f32.mrb[0].mxu0
    %v1117 = vadd.f32 %v1043, %v1116
    %v1118 = vpop.f32.mrb[0].mxu0
    %1119 = vdwg.mxu0
    %v1120 = vtanh.pop %v1117
    %vm1121 = vcmask 48128
    %v1122 = vsel %vm1121, %v1120, 0.0
    %v1123 = vrot.slane %v1122, 4
    %v1124 = vadd.f32 %v1122, %v1123
    %v1125 = vrot.slane %v1124, 2
    %v1126 = vadd.f32 %v1124, %v1125
    %v1127 = vrot.slane %v1126, 1
    %v1128 = vadd.f32 %v1126, %v1127
    %v1129 = vmul.f32 %v1128, %v179
    %v1130 = vsub.f32 %v1120, %v1129
    %v1131 = vmul.f32 %v1130, %v1130
    %v1132 = vsel %vm1121, %v1131, 0.0
    %v1133 = vrot.slane %v1132, 4
    %v1134 = vadd.f32 %v1132, %v1133
    %v1135 = vrot.slane %v1134, 2
    %v1136 = vadd.f32 %v1134, %v1135
    %v1137 = vrot.slane %v1136, 1
    %v1138 = vadd.f32 %v1136, %v1137
    %v1139 = vmul.f32 %v1138, %v179
    %v1140 = vadd.f32 %v1139, 1e-05
    %v1141 = vrsqrt.pop %v1140
    %v1142 = vld [vmem:[#allocation6 + $0x23] ss:$0 sm:$0xff]
    %v1143 = vmul.f32 %v1141, %v1142
    %v1144 = vmul.f32 %v1130, %v1143
    %v1145 = vld [vmem:[#allocation6 + $0x24] ss:$0 sm:$0xff]
    %v1146 = vadd.f32 %v1144, %v1145
    %1148 = vrot.lane.b32.xlu0 %v1146, 36
    %v1149 = vpop.permute.xlu0 %1148
    %vm1151 = vcmask 343328
    %1152 = vst.msk [vmem:[%s4] sm:$0xff] %vm1151, %v1149
    %v1153 = vld [vmem:[#allocation4 + $0x88] sm:$0x3f]
    %v1154 = vld [vmem:[#allocation6 + $0x25] ss:$0 sm:$0xff]
    %v1155 = vsel %vm1121, %v1146, 0
    %v1158 = vsel %vm817, %v1153, 0
    %1160 = vmatprep.subr.mxu0 0.0
    %1161 = vmatpush1.msra.mxu0 %v1158
    %1162 = vmatprep.subr.mxu0 0.0
    %1163 = vmatpush1.msra.mxu0 0.0
    %1164 = vmatprep.subr.mxu0 0.0
    %1165 = vmatpush1.msra.mxu0 0.0
    %1166 = vmatprep.subr.mxu0 0.0
    %1167 = vmatpush1.msra.mxu0 0.0
    %1168 = vmatprep.subr.mxu0 0.0
    %1169 = vmatpush1.msra.mxu0 0.0
    %1170 = vmatprep.subr.mxu0 0.0
    %1171 = vmatpush1.msra.mxu0 0.0
    %1172 = vmatprep.subr.mxu0 0.0
    %1173 = vmatpush1.msra.mxu0 0.0
    %1174 = vmatprep.subr.mxu0 0.0
    %1175 = vmatpush1.msra.mxu0 0.0
    %1176 = vmatprep.subr.mxu0 0.0
    %1177 = vmatpush1.msra.mxu0 0.0
    %1178 = vmatprep.subr.mxu0 0.0
    %1179 = vmatpush1.msra.mxu0 0.0
    %1180 = vmatprep.subr.mxu0 0.0
    %1181 = vmatpush1.msra.mxu0 0.0
    %1182 = vmatprep.subr.mxu0 0.0
    %1183 = vmatpush1.msra.mxu0 0.0
    %1184 = vmatprep.subr.mxu0 0.0
    %1185 = vmatpush1.msra.mxu0 0.0
    %1186 = vmatprep.subr.mxu0 0.0
    %1187 = vmatpush1.msra.mxu0 0.0
    %1188 = vmatprep.subr.mxu0 0.0
    %1189 = vmatpush1.msra.mxu0 0.0
    %1190 = vmatprep.subr.mxu0 0.0
    %1191 = vmatpush1.msra.mxu0 0.0
    %1192 = vmatprep.subr.mxu0 0.0
    %1193 = vmatpush1.msra.mxu0 0.0
    %1194 = vmatprep.subr.mxu0 0.0
    %1195 = vmatpush1.msra.mxu0 0.0
    %1196 = vmatprep.subr.mxu0 0.0
    %1197 = vmatpush1.msra.mxu0 0.0
    %1198 = vmatprep.subr.mxu0 0.0
    %1199 = vmatpush1.msra.mxu0 0.0
    %1200 = vmatprep.subr.mxu0 0.0
    %1201 = vmatpush1.msra.mxu0 0.0
    %1202 = vmatprep.subr.mxu0 0.0
    %1203 = vmatpush1.msra.mxu0 0.0
    %1204 = vmatprep.subr.mxu0 0.0
    %1205 = vmatpush1.msra.mxu0 0.0
    %1206 = vmatprep.subr.mxu0 0.0
    %1207 = vmatpush1.msra.mxu0 0.0
    %1208 = vmatprep.subr.mxu0 0.0
    %1209 = vmatpush1.msra.mxu0 0.0
    %1210 = vmatprep.subr.mxu0 0.0
    %1211 = vmatpush1.msra.mxu0 0.0
    %1212 = vmatprep.subr.mxu0 0.0
    %1213 = vmatpush1.msra.mxu0 0.0
    %1214 = vmatprep.subr.mxu0 0.0
    %1215 = vmatpush1.msra.mxu0 0.0
    %1216 = vmatprep.subr.mxu0 0.0
    %1217 = vmatpush1.msra.mxu0 0.0
    %1218 = vmatprep.subr.mxu0 0.0
    %1219 = vmatpush1.msra.mxu0 0.0
    %1220 = vmatprep.subr.mxu0 0.0
    %1221 = vmatpush1.msra.mxu0 0.0
    %1222 = vmatprep.subr.mxu0 0.0
    %1223 = vmatpush1.msra.mxu0 0.0
    %1224 = vmatprep.mubr.f32.mxu0 0.0
    %1225 = vmatmul.mubr.f32.gmra.mrb[0].mxu0 %v1155
    %v1226 = vpop.f32.mrb[0].mxu0
    %v1227 = vadd.f32 %v1154, %v1226
    %v1228 = vpop.f32.mrb[0].mxu0
    %1229 = vdwg.mxu0
    %v1230 = vtanh.pop %v1227
    %v1231 = vsel %vm1121, %v1230, 0.0
    %v1232 = vrot.slane %v1231, 4
    %v1233 = vadd.f32 %v1231, %v1232
    %v1234 = vrot.slane %v1233, 2
    %v1235 = vadd.f32 %v1233, %v1234
    %v1236 = vrot.slane %v1235, 1
    %v1237 = vadd.f32 %v1235, %v1236
    %v1238 = vmul.f32 %v1237, %v179
    %v1239 = vsub.f32 %v1230, %v1238
    %v1240 = vmul.f32 %v1239, %v1239
    %v1241 = vsel %vm1121, %v1240, 0.0
    %v1242 = vrot.slane %v1241, 4
    %v1243 = vadd.f32 %v1241, %v1242
    %v1244 = vrot.slane %v1243, 2
    %v1245 = vadd.f32 %v1243, %v1244
    %v1246 = vrot.slane %v1245, 1
    %v1247 = vadd.f32 %v1245, %v1246
    %v1248 = vmul.f32 %v1247, %v179
    %v1249 = vadd.f32 %v1248, 1e-05
    %v1250 = vrsqrt.pop %v1249
    %v1251 = vld [vmem:[#allocation6 + $0x26] ss:$0 sm:$0xff]
    %v1252 = vmul.f32 %v1250, %v1251
    %v1253 = vmul.f32 %v1239, %v1252
    %v1254 = vld [vmem:[#allocation6 + $0x27] ss:$0 sm:$0xff]
    %v1255 = vadd.f32 %v1253, %v1254
    %1257 = vrot.lane.b32.xlu0 %v1255, 42
    %v1258 = vpop.permute.xlu0 %1257
    %vm1260 = vcmask 392528
    %1261 = vst.msk [vmem:[%s4] sm:$0xff] %vm1260, %v1258
    %v1262 = vld [vmem:[#allocation4 + $0x90] sm:$0xff]
    %v1263 = vld [vmem:[#allocation4 + $0x98] sm:$0xff]
    %v1264 = vld [vmem:[#allocation4 + $0xa0] sm:$0xff]
    %v1265 = vld [vmem:[#allocation4 + $0xa8] sm:$0xff]
    %v1266 = vld [vmem:[#allocation4 + $0xb0] sm:$0xff]
    %v1267 = vld [vmem:[#allocation4 + $0xb8] sm:$0xff]
    %v1268 = vld [vmem:[%s4] sm:$0xff]
    %v1269 = vld [vmem:[#allocation6 + $0x30] ss:$0 sm:$0xff]
    %vm1270 = vcmask 392192
    %v1272 = vsel %vm1270, %v1268, 0
    %1274 = vmatprep.subr.mxu0 0.0
    %1275 = vmatpush1.msra.mxu0 %v1262
    %1276 = vmatprep.subr.mxu0 0.0
    %1277 = vmatpush1.msra.mxu0 %v1263
    %1278 = vmatprep.subr.mxu0 0.0
    %1279 = vmatpush1.msra.mxu0 %v1264
    %1280 = vmatprep.subr.mxu0 0.0
    %1281 = vmatpush1.msra.mxu0 %v1265
    %1282 = vmatprep.subr.mxu0 0.0
    %1283 = vmatpush1.msra.mxu0 %v1266
    %1284 = vmatprep.subr.mxu0 0.0
    %1285 = vmatpush1.msra.mxu0 %v1267
    %1286 = vmatprep.subr.mxu0 0.0
    %1287 = vmatpush1.msra.mxu0 0.0
    %1288 = vmatprep.subr.mxu0 0.0
    %1289 = vmatpush1.msra.mxu0 0.0
    %1290 = vmatprep.subr.mxu0 0.0
    %1291 = vmatpush1.msra.mxu0 0.0
    %1292 = vmatprep.subr.mxu0 0.0
    %1293 = vmatpush1.msra.mxu0 0.0
    %1294 = vmatprep.subr.mxu0 0.0
    %1295 = vmatpush1.msra.mxu0 0.0
    %1296 = vmatprep.subr.mxu0 0.0
    %1297 = vmatpush1.msra.mxu0 0.0
    %1298 = vmatprep.subr.mxu0 0.0
    %1299 = vmatpush1.msra.mxu0 0.0
    %1300 = vmatprep.subr.mxu0 0.0
    %1301 = vmatpush1.msra.mxu0 0.0
    %1302 = vmatprep.subr.mxu0 0.0
    %1303 = vmatpush1.msra.mxu0 0.0
    %1304 = vmatprep.subr.mxu0 0.0
    %1305 = vmatpush1.msra.mxu0 0.0
    %1306 = vmatprep.subr.mxu0 0.0
    %1307 = vmatpush1.msra.mxu0 0.0
    %1308 = vmatprep.subr.mxu0 0.0
    %1309 = vmatpush1.msra.mxu0 0.0
    %1310 = vmatprep.subr.mxu0 0.0
    %1311 = vmatpush1.msra.mxu0 0.0
    %1312 = vmatprep.subr.mxu0 0.0
    %1313 = vmatpush1.msra.mxu0 0.0
    %1314 = vmatprep.subr.mxu0 0.0
    %1315 = vmatpush1.msra.mxu0 0.0
    %1316 = vmatprep.subr.mxu0 0.0
    %1317 = vmatpush1.msra.mxu0 0.0
    %1318 = vmatprep.subr.mxu0 0.0
    %1319 = vmatpush1.msra.mxu0 0.0
    %1320 = vmatprep.subr.mxu0 0.0
    %1321 = vmatpush1.msra.mxu0 0.0
    %1322 = vmatprep.subr.mxu0 0.0
    %1323 = vmatpush1.msra.mxu0 0.0
    %1324 = vmatprep.subr.mxu0 0.0
    %1325 = vmatpush1.msra.mxu0 0.0
    %1326 = vmatprep.subr.mxu0 0.0
    %1327 = vmatpush1.msra.mxu0 0.0
    %1328 = vmatprep.subr.mxu0 0.0
    %1329 = vmatpush1.msra.mxu0 0.0
    %1330 = vmatprep.subr.mxu0 0.0
    %1331 = vmatpush1.msra.mxu0 0.0
    %1332 = vmatprep.subr.mxu0 0.0
    %1333 = vmatpush1.msra.mxu0 0.0
    %1334 = vmatprep.subr.mxu0 0.0
    %1335 = vmatpush1.msra.mxu0 0.0
    %1336 = vmatprep.subr.mxu0 0.0
    %1337 = vmatpush1.msra.mxu0 0.0
    %1338 = vmatprep.mubr.f32.mxu0 0.0
    %1339 = vmatmul.mubr.f32.gmra.mrb[0].mxu0 %v1272
    %v1340 = vpop.f32.mrb[0].mxu0
    %v1341 = vadd.f32 %v1269, %v1340
    %v1342 = vpop.f32.mrb[0].mxu0
    %1343 = vdwg.mxu0
    %v1344 = vtanh.pop %v1341
    %v1345 = vld [vmem:[#allocation6 + $0x31] ss:$0 sm:$0xff]
    %v1346 = vmul.f32 %v1344, %v1345
    %v1347 = vld [vmem:[#allocation6 + $0x32] ss:$0 sm:$0xff]
    %v1348 = vadd.f32 %v1346, %v1347
    %1350 = vrot.lane.b32.xlu0 %v1348, 48
    %v1351 = vpop.permute.xlu0 %1350
    %vm1353 = vcmask 458112
    %1354 = vst.msk [vmem:[%s4] sm:$0xff] %vm1353, %v1351
    // Predicated region
    $region30: #{forward.1} parent=1 // pred_check
      _
    $region31: #{forward.1} parent=1 // pred_check_branch
      %1356 = sbr.rel (0) target = $region33
    $region32: #{forward.1} parent=1 // pred_region
      _
    $region33: #{forward.1} parent=1 // pred_fallthru
      _
    // Predicated region
    $region34: #{forward.1} parent=1 // pred_check
      _
    $region35: #{forward.1} parent=1 // pred_check_branch
      %1358 = sbr.rel (0) target = $region37
    $region36: #{forward.1} parent=1 // pred_region
      _
    $region37: #{forward.1} parent=1 // pred_fallthru
      _
    %1359 = vsyncpa [#allocation3], 1
    %1360 = vsyncpa [#allocation5], 1

</llo_original>
